<compile_context>
chip_gen: v7x
topology: tpu7x:2x2x1
jax: 0.10.0
libtpu: 0.0.40
codegen_flags: <defaults>
</compile_context>

<pallas_src>
import functools
import math

import jax
import jax.numpy as jnp
from jax.experimental import pallas as pl
from jax.experimental.pallas import tpu as pltpu


def _softmax_lastdim(x):
    m = jnp.max(x, axis=-1, keepdims=True)
    e = jnp.exp(x - m)
    s = jnp.sum(e, axis=-1, keepdims=True)
    return e * pl.reciprocal(s, approx=True)


def _pick_tile(n, target=128):
    """Largest divisor of n that is <= target, preferring multiples of 8 so a
    second-to-last block dim stays (8,128)-legal when it is not the full dim."""
    if n <= target:
        return n
    best = 1
    for d in range(target, 0, -1):
        if n % d == 0:
            if d % 8 == 0:
                return d
            if best == 1:
                best = d
    return best


# --------------------------------------------------------------------------
# Stage 1: f_qkv pointwise conv + attention over the frequency axis.
# One (t_tile, F) tile of one batch element per grid step.
# --------------------------------------------------------------------------
def asa_freq_kernel(x_ref, wf_ref, bf_ref, fout_ref, *, d_c):
    """
    x_ref    : (Tt, F, C)    activations, channels on the lane axis
    wf_ref   : (C, 3*d_c)    f_qkv 1x1 conv weight (in,out), grouped [q|k|v];
                             q columns pre-scaled by 1/sqrt(d_c)
    bf_ref   : (1, 3*d_c)
    fout_ref : (Tt, F, d_c)  frequency-attention output
    """
    Tt, F, C = x_ref.shape
    x = x_ref[...]
    xf = x.reshape(Tt * F, C)

    # pointwise conv: single MXU pass over x, f32 accumulate
    fqkv = jnp.dot(xf, wf_ref[...], preferred_element_type=jnp.float32) + bf_ref[...]
    fqkv = fqkv.reshape(Tt, F, 3 * d_c)
    qf = fqkv[..., 0 * d_c:1 * d_c]          # already scaled by 1/sqrt(d_c)
    kf = fqkv[..., 1 * d_c:2 * d_c]
    v = fqkv[..., 2 * d_c:3 * d_c]

    # frequency attention: batch axis t leading, contraction c on lanes
    f_score = jnp.einsum('tfc,tyc->tfy', qf, kf,
                         preferred_element_type=jnp.float32)
    f_score = _softmax_lastdim(f_score)
    fout_ref[...] = jnp.einsum('tfy,tyc->tfc', f_score, v,
                               preferred_element_type=jnp.float32)


# --------------------------------------------------------------------------
# Stage 2: t_qk pointwise conv + causal time attention + proj + residual.
# One (T, f_tile) tile of one batch element per grid step.
# --------------------------------------------------------------------------
def asa_time_kernel(fout_ref, x_ref, wt_ref, bt_ref, wp_ref, bp_ref, mask_ref,
                    o_ref, *, d_c):
    """
    fout_ref : (T, Ft, d_c)  stage-1 output
    x_ref    : (T, Ft, C)    activations (t_qk conv input + residual)
    wt_ref   : (C, 2*d_c)    t_qk 1x1 conv weight, grouped [q|k]; q pre-scaled
    bt_ref   : (1, 2*d_c)
    wp_ref   : (d_c, C)      proj 1x1 conv weight
    bp_ref   : (1, C)
    mask_ref : (T, T)        additive causal bias (0 on/below diag, -1e30 above)
    o_ref    : (T, Ft, C)
    """
    T, Ft, C = x_ref.shape
    x = x_ref[...]
    xf = x.reshape(T * Ft, C)

    tqk = jnp.dot(xf, wt_ref[...], preferred_element_type=jnp.float32) + bt_ref[...]
    tqk = tqk.reshape(T, Ft, 2 * d_c)

    # one explicit transpose of the small d_c-wide tensors: f becomes the
    # leading (batch) axis, channels stay on lanes
    tqk_f = jnp.transpose(tqk, (1, 0, 2))               # (Ft, T, 2*d_c)
    f_out = jnp.transpose(fout_ref[...], (1, 0, 2))     # (Ft, T, d_c)
    qt = tqk_f[..., 0 * d_c:1 * d_c]                    # already scaled
    kt = tqk_f[..., 1 * d_c:2 * d_c]

    t_score = jnp.einsum('ftc,fyc->fty', qt, kt,
                         preferred_element_type=jnp.float32)
    t_score = t_score + mask_ref[...][None, :, :]       # causal additive bias
    t_score = _softmax_lastdim(t_score)
    t_out = jnp.einsum('fty,fyc->ftc', t_score, f_out,
                       preferred_element_type=jnp.float32)

    # back to (T, Ft, d_c), project to C channels, add residual
    t_out = jnp.transpose(t_out, (1, 0, 2)).reshape(T * Ft, d_c)
    out = jnp.dot(t_out, wp_ref[...], preferred_element_type=jnp.float32) + bp_ref[...]
    o_ref[...] = out.reshape(T, Ft, C) + x


# --------------------------------------------------------------------------
# Wrapper
# --------------------------------------------------------------------------
def asa_pallas(inp_nchw, wf, bf, wt, bt, wp, bp, *, d_c, causal=True):
    """inp_nchw: (B, C, F, T) float32.  Returns (B, C, F, T) float32."""
    B, C, F, T = inp_nchw.shape
    f32 = jnp.float32

    # ---- tiny host-side parameter prep (once per call) ----------------------
    scale = f32(1.0 / math.sqrt(d_c))
    wf_s = wf.at[:, :d_c].multiply(scale)               # fold 1/sqrt(d_c) into q
    bf_s = bf.at[:d_c].multiply(scale).reshape(1, 3 * d_c)
    wt_s = wt.at[:, :d_c].multiply(scale)
    bt_s = bt.at[:d_c].multiply(scale).reshape(1, 2 * d_c)
    bp_r = bp.reshape(1, C)

    # causal mask hoisted out of the kernels: additive bias input
    if causal:
        row = jax.lax.broadcasted_iota(jnp.int32, (T, T), 0)
        col = jax.lax.broadcasted_iota(jnp.int32, (T, T), 1)
        mask_bias = jnp.where(col > row, f32(-1e30), f32(0.0))
    else:
        mask_bias = jnp.zeros((T, T), f32)

    # channels-last activation layout (B, T, F, C); lane axis = C
    x = jnp.transpose(inp_nchw, (0, 3, 2, 1))

    t_tile = _pick_tile(T)
    f_tile = _pick_tile(F)
    cparams = pltpu.CompilerParams(
        dimension_semantics=("parallel", "parallel"),
        vmem_limit_bytes=32 * 1024 * 1024)

    # ---- stage 1: frequency attention, tiled over (B, T) --------------------
    f_out = pl.pallas_call(
        functools.partial(asa_freq_kernel, d_c=d_c),
        out_shape=jax.ShapeDtypeStruct((B, T, F, d_c), f32),
        grid_spec=pltpu.PrefetchScalarGridSpec(
            num_scalar_prefetch=0,
            grid=(B, T // t_tile),
            in_specs=[
                pl.BlockSpec((pl.Squeezed(), t_tile, F, C),
                             lambda b, t: (b, t, 0, 0)),
                pl.BlockSpec((C, 3 * d_c), lambda b, t: (0, 0)),
                pl.BlockSpec((1, 3 * d_c), lambda b, t: (0, 0)),
            ],
            out_specs=pl.BlockSpec((pl.Squeezed(), t_tile, F, d_c),
                                   lambda b, t: (b, t, 0, 0)),
        ),
        compiler_params=cparams,
    )(x, wf_s, bf_s)

    # ---- stage 2: causal time attention + proj + residual, tiled over (B, F) -
    out_tfc = pl.pallas_call(
        functools.partial(asa_time_kernel, d_c=d_c),
        out_shape=jax.ShapeDtypeStruct((B, T, F, C), f32),
        grid_spec=pltpu.PrefetchScalarGridSpec(
            num_scalar_prefetch=0,
            grid=(B, F // f_tile),
            in_specs=[
                pl.BlockSpec((pl.Squeezed(), T, f_tile, d_c),
                             lambda b, f: (b, 0, f, 0)),
                pl.BlockSpec((pl.Squeezed(), T, f_tile, C),
                             lambda b, f: (b, 0, f, 0)),
                pl.BlockSpec((C, 2 * d_c), lambda b, f: (0, 0)),
                pl.BlockSpec((1, 2 * d_c), lambda b, f: (0, 0)),
                pl.BlockSpec((d_c, C), lambda b, f: (0, 0)),
                pl.BlockSpec((1, C), lambda b, f: (0, 0)),
                pl.BlockSpec((T, T), lambda b, f: (0, 0)),
            ],
            out_specs=pl.BlockSpec((pl.Squeezed(), T, f_tile, C),
                                   lambda b, f: (b, 0, f, 0)),
        ),
        compiler_params=cparams,
    )(f_out, x, wt_s, bt_s, wp, bp_r, mask_bias)

    return jnp.transpose(out_tfc, (0, 3, 2, 1))          # (B,T,F,C) -> (B,C,F,T)


# --------------------------------------------------------------------------
# Pure-JAX reference (HIGHEST precision) mirroring the PyTorch forward (NCHW).
# --------------------------------------------------------------------------
def asa_reference(inp_nchw, wf, bf, wt, bt, wp, bp, *, d_c, causal=True):
    B, C, F, T = inp_nchw.shape
    prec = jax.lax.Precision.HIGHEST

    fqkv = jnp.einsum('io,bift->boft', wf, inp_nchw, precision=prec) \
        + bf[:, None, None]
    qf, kf, v = fqkv[:, :d_c], fqkv[:, d_c:2 * d_c], fqkv[:, 2 * d_c:]
    f_score = jnp.einsum('bcft,bcyt->btfy', qf, kf, precision=prec) / d_c ** 0.5
    f_score = jax.nn.softmax(f_score, axis=-1)
    f_out = jnp.einsum('btfy,bcyt->bcft', f_score, v, precision=prec)

    tqk = jnp.einsum('io,bift->boft', wt, inp_nchw, precision=prec) \
        + bt[:, None, None]
    qt, kt = tqk[:, :d_c], tqk[:, d_c:]
    t_score = jnp.einsum('bcft,bcfy->bfty', qt, kt, precision=prec) / d_c ** 0.5
    if causal:
        mask = jnp.triu(jnp.ones((T, T), dtype=bool), k=1)
        t_score = jnp.where(mask, -jnp.finfo(t_score.dtype).max, t_score)
    t_score = jax.nn.softmax(t_score, axis=-1)
    t_out = jnp.einsum('bfty,bcfy->bcft', t_score, f_out, precision=prec)

    out = jnp.einsum('io,bift->boft', wp, t_out, precision=prec) \
        + bp[:, None, None]
    return out + inp_nchw


if __name__ == "__main__":
    # Small shapes consistent with the module: c must be divisible by 8.
    B, C, F, T = 2, 32, 16, 8
    d_c = C // 8

    key = jax.random.PRNGKey(0)
    k_in, k_wf, k_bf, k_wt, k_bt, k_wp, k_bp = jax.random.split(key, 7)

    inp = jax.random.normal(k_in, (B, C, F, T), dtype=jnp.float32)

    # Deterministic synthetic 1x1-conv parameters (stored as (in, out)).
    wf = 0.1 * jax.random.normal(k_wf, (C, 3 * d_c), dtype=jnp.float32)
    bf = 0.1 * jax.random.normal(k_bf, (3 * d_c,), dtype=jnp.float32)
    wt = 0.1 * jax.random.normal(k_wt, (C, 2 * d_c), dtype=jnp.float32)
    bt = 0.1 * jax.random.normal(k_bt, (2 * d_c,), dtype=jnp.float32)
    wp = 0.1 * jax.random.normal(k_wp, (d_c, C), dtype=jnp.float32)
    bp = 0.1 * jax.random.normal(k_bp, (C,), dtype=jnp.float32)

    out = jax.block_until_ready(
        asa_pallas(inp, wf, bf, wt, bt, wp, bp, d_c=d_c, causal=True))
    ref = jax.block_until_ready(
        asa_reference(inp, wf, bf, wt, bt, wp, bp, d_c=d_c, causal=True))

    assert out.shape == (B, C, F, T)
    assert bool(jnp.all(jnp.isfinite(out)))
    # Kernel matmuls run at default (single-pass bf16 MXU) precision with f32
    # accumulation; reference is HIGHEST-precision f32, hence the looser bound.
    err = float(jnp.max(jnp.abs(out - ref)))
    assert err < 3e-2, err

    # Also exercise the non-causal path.
    out_nc = jax.block_until_ready(
        asa_pallas(inp, wf, bf, wt, bt, wp, bp, d_c=d_c, causal=False))
    ref_nc = jax.block_until_ready(
        asa_reference(inp, wf, bf, wt, bt, wp, bp, d_c=d_c, causal=False))
    err_nc = float(jnp.max(jnp.abs(out_nc - ref_nc)))
    assert err_nc < 3e-2, err_nc

    print("KERNEL_OK")
</pallas_src>

<mosaic_0001>
module attributes {stable_mosaic.version = 11 : i64} {
  func.func @asa_freq_kernel(%arg0: i32, %arg1: i32, %arg2: memref<1x8x16x32xf32, #tpu.memory_space<vmem>>, %arg3: memref<32x12xf32, #tpu.memory_space<vmem>>, %arg4: memref<1x12xf32, #tpu.memory_space<vmem>>, %arg5: memref<1x8x16x4xf32, #tpu.memory_space<vmem>>) attributes {dimension_semantics = [#tpu.dimension_semantics<parallel>, #tpu.dimension_semantics<parallel>], iteration_bounds = array<i64: 2, 1>, scalar_prefetch = 0 : i64, scratch_operands = 0 : i64, tpu.core_type = #tpu.core_type<tc>, window_params = [{transform_indices = @transform_0, window_bounds = array<i64: 1, 8, 16, 32>}, {pipeline_mode = #tpu.pipeline_mode<synchronous>, transform_indices = @transform_1, window_bounds = array<i64: 32, 12>}, {pipeline_mode = #tpu.pipeline_mode<synchronous>, transform_indices = @transform_2, window_bounds = array<i64: 1, 12>}, {transform_indices = @transform_3, window_bounds = array<i64: 1, 8, 16, 4>}]} {
    %c0 = arith.constant 0 : index
    %c0_0 = arith.constant 0 : index
    %c0_1 = arith.constant 0 : index
    %c0_2 = arith.constant 0 : index
    %0 = vector.load %arg2[%c0, %c0_0, %c0_1, %c0_2] : memref<1x8x16x32xf32, #tpu.memory_space<vmem>>, vector<1x8x16x32xf32>
    %1 = vector.shape_cast %0 : vector<1x8x16x32xf32> to vector<8x16x32xf32>
    %2 = vector.shape_cast %1 : vector<8x16x32xf32> to vector<128x32xf32>
    %c0_3 = arith.constant 0 : index
    %c0_4 = arith.constant 0 : index
    %3 = vector.load %arg3[%c0_3, %c0_4] : memref<32x12xf32, #tpu.memory_space<vmem>>, vector<32x12xf32>
    %cst = arith.constant dense<0.000000e+00> : vector<128x12xf32>
    %4 = tpu.matmul %2, %3, %cst {dimension_numbers = #tpu.dot_dimension_numbers<[1], [0], [0], [1], [0, 0, 1, 1], [], []>} : vector<128x32xf32>, vector<32x12xf32>, vector<128x12xf32> -> vector<128x12xf32>
    %c0_5 = arith.constant 0 : index
    %c0_6 = arith.constant 0 : index
    %5 = vector.load %arg4[%c0_5, %c0_6] : memref<1x12xf32, #tpu.memory_space<vmem>>, vector<1x12xf32>
    %6 = vector.broadcast %5 : vector<1x12xf32> to vector<128x12xf32>
    %7 = arith.addf %4, %6 : vector<128x12xf32>
    %8 = vector.shape_cast %7 : vector<128x12xf32> to vector<8x16x12xf32>
    %9 = vector.extract_strided_slice %8 {offsets = [0, 0, 0], sizes = [8, 16, 4], strides = [1, 1, 1]} : vector<8x16x12xf32> to vector<8x16x4xf32>
    %10 = vector.extract_strided_slice %8 {offsets = [0, 0, 4], sizes = [8, 16, 4], strides = [1, 1, 1]} : vector<8x16x12xf32> to vector<8x16x4xf32>
    %11 = vector.extract_strided_slice %8 {offsets = [0, 0, 8], sizes = [8, 16, 4], strides = [1, 1, 1]} : vector<8x16x12xf32> to vector<8x16x4xf32>
    "tpu.trace_start"() <{level = 10 : i32, message = "tfc,tyc->tfy"}> : () -> ()
    %cst_7 = arith.constant dense<0.000000e+00> : vector<8x16x16xf32>
    %12 = tpu.matmul %9, %10, %cst_7 {dimension_numbers = #tpu.dot_dimension_numbers<[2], [2], [1], [1], [0, 0, 0, 1, 1, 1], [0], [0]>} : vector<8x16x4xf32>, vector<8x16x4xf32>, vector<8x16x16xf32> -> vector<8x16x16xf32>
    "tpu.trace_stop"() : () -> ()
    %cst_8 = arith.constant dense<0xFF800000> : vector<8x16xf32>
    %13 = vector.multi_reduction <maximumf>, %12, %cst_8 [2] : vector<8x16x16xf32> to vector<8x16xf32>
    %14 = vector.shape_cast %13 : vector<8x16xf32> to vector<8x16x1xf32>
    %15 = vector.broadcast %14 : vector<8x16x1xf32> to vector<8x16x16xf32>
    %16 = arith.subf %12, %15 : vector<8x16x16xf32>
    %17 = math.exp %16 : vector<8x16x16xf32>
    %cst_9 = arith.constant dense<0.000000e+00> : vector<8x16xf32>
    %18 = vector.multi_reduction <add>, %17, %cst_9 [2] : vector<8x16x16xf32> to vector<8x16xf32>
    %19 = vector.shape_cast %18 : vector<8x16xf32> to vector<8x16x1xf32>
    %20 = tpu.reciprocal %19 {approx = true} : vector<8x16x1xf32> -> vector<8x16x1xf32>
    %21 = vector.broadcast %20 : vector<8x16x1xf32> to vector<8x16x16xf32>
    %22 = arith.mulf %17, %21 : vector<8x16x16xf32>
    "tpu.trace_start"() <{level = 10 : i32, message = "tfy,tyc->tfc"}> : () -> ()
    %cst_10 = arith.constant dense<0.000000e+00> : vector<8x16x4xf32>
    %23 = tpu.matmul %22, %11, %cst_10 {dimension_numbers = #tpu.dot_dimension_numbers<[2], [1], [1], [2], [0, 0, 0, 1, 1, 2], [0], [0]>} : vector<8x16x16xf32>, vector<8x16x4xf32>, vector<8x16x4xf32> -> vector<8x16x4xf32>
    "tpu.trace_stop"() : () -> ()
    %c0_11 = arith.constant 0 : index
    %c0_12 = arith.constant 0 : index
    %c0_13 = arith.constant 0 : index
    %c0_14 = arith.constant 0 : index
    %24 = vector.load %arg5[%c0_11, %c0_12, %c0_13, %c0_14] : memref<1x8x16x4xf32, #tpu.memory_space<vmem>>, vector<1x8x16x4xf32>
    %25 = vector.shape_cast %24 : vector<1x8x16x4xf32> to vector<8x16x4xf32>
    %26 = vector.shape_cast %23 : vector<8x16x4xf32> to vector<1x8x16x4xf32>
    tpu.vector_store %arg5[%c0_11, %c0_12, %c0_13, %c0_14], %26 {strides = array<i32>} : memref<1x8x16x4xf32, #tpu.memory_space<vmem>>, vector<1x8x16x4xf32>,
    return
  }
  func.func @transform_0(%arg0: i32, %arg1: i32) -> (i32, i32, i32, i32) {
    %c0_i32 = arith.constant 0 : i32
    %c0_i32_0 = arith.constant 0 : i32
    %c0_i32_1 = arith.constant 0 : i32
    return %arg0, %arg1, %c0_i32, %c0_i32_0 : i32, i32, i32, i32
  }
  func.func @transform_1(%arg0: i32, %arg1: i32) -> (i32, i32) {
    %c0_i32 = arith.constant 0 : i32
    %c0_i32_0 = arith.constant 0 : i32
    %c0_i32_1 = arith.constant 0 : i32
    return %c0_i32, %c0_i32_0 : i32, i32
  }
  func.func @transform_2(%arg0: i32, %arg1: i32) -> (i32, i32) {
    %c0_i32 = arith.constant 0 : i32
    %c0_i32_0 = arith.constant 0 : i32
    %c0_i32_1 = arith.constant 0 : i32
    return %c0_i32, %c0_i32_0 : i32, i32
  }
  func.func @transform_3(%arg0: i32, %arg1: i32) -> (i32, i32, i32, i32) {
    %c0_i32 = arith.constant 0 : i32
    %c0_i32_0 = arith.constant 0 : i32
    %c0_i32_1 = arith.constant 0 : i32
    return %arg0, %arg1, %c0_i32, %c0_i32_0 : i32, i32, i32, i32
  }
}

</mosaic_0001>

<llo_original>
// kernel: tpu_custom_call.1
$region0: #{tpu_custom_call.1}
  #allocation0 [shape = 'u32[]', space=smem, size = 0x4, offset = 0x4, fixed_abs, tag = 'smem constant byte address 0x4 - core index']
  #allocation1 [shape = 'u32[144,128]{1,0:T(1,128)}', space=vmem, size = 0x12000, scoped, tag = 'internal scratch']
  %s0 = inlined_call_operand.hbm [shape: f32[2,8,16,32], index: 0, kind: input, shape index: {}]
  %s1 = inlined_call_operand.vmem [shape: f32[32,12], index: 1, kind: input, shape index: {}]
  %s2 = inlined_call_operand.vmem [shape: f32[1,12], index: 2, kind: input, shape index: {}]
  %s3 = inlined_call_operand.vmem [shape: f32[2,8,16,4], index: 3, kind: output, shape index: {}]
  %s4 = sld [smem:[#allocation0]]
  $region49: #{tpu_custom_call.1} parent=0
    _
  %s6 = ssub.s32 1, %s4
  %s7 = scalar_select 0, %s6, %s4
  $region1: #{tpu_custom_call.1} parent=0
    #allocation2 [shape = 'u8[131072]{0}', space=vmem, size = 0x20000, scoped, tag = 'input window, operand 0']
    #allocation3 [shape = 's32[2]{0}', space=sflag, size = 0x8, scoped, tag = 'scoped memory for tpu_custom_call.1']
    %8 = vsyncpa [#allocation3], 0
    %s9 = scalar_lea.sflag [#allocation3], 1
    %10 = vsyncpa %s9, 0
    loop: start=0, step=1, limit=4
    $region2: #{tpu_custom_call.1} parent=1 // loop_pre_header
      _
    $region3: #{tpu_custom_call.1} parent=1 // loop_header
      %s12 = sphi 0, %s16
      %p13 = scmp.ge.s32.totalorder %s12, 4
      %s19 = sphi 0, %s31
      %s20 = sphi 0, %s27
      %s21 = sphi 0, %s19
      %s22 = sphi 0, %s20
      %s23 = sphi 0, %s21
      %s24 = sphi 0, %s22
      %s36 = sphi 0, %s38
      %s39 = sphi 0, %s36
      %s40 = sphi 0, %s39
      %s56 = sphi 0, %s40
      %s60 = sphi 0, %s60
      %s62 = sphi 0, %s60
      %s63 = sphi 0, %s62
      %s77 = sphi 0, %s63
      %s81 = sphi 0, %s81
      %s83 = sphi 0, %s81
      %s84 = sphi 0, %s83
      %s98 = sphi 0, %s84
      %s106 = sphi 0, %s108
      %s109 = sphi 0, %s106
      %s110 = sphi 0, %s109
      %s126 = sphi 0, %s110
    $region4: #{tpu_custom_call.1} parent=1 // loop_header_branch
      %15 = sbr.rel (%p13) target = $region8
    $region5: #{tpu_custom_call.1} parent=1 // loop_body
      %s17 = ssub.s32 %s12, 1
      %s18 = ssub.s32 %s12, 2
      %s25 = sadd.s32 1, %s20
      %p26 = scmp.ge.s32.totalorder %s25, 1
      %s27 = scalar_select %p26, 0, %s25
      %s28 = sadd.s32 1, %s19
      %s29 = scalar_select %p26, %s28, %s19
      %p30 = scmp.ge.s32.totalorder %s29, 2
      %s31 = scalar_select %p30, 0, %s29
      %s32 = ssub.s32 %s19, %s31
      %s33 = ssub.s32 %s20, %s27
      %s34 = sor.u32 %s32, %s33
      %p35 = scmp.eq.s32.totalorder %s34, 0
      %s37 = sadd.s32 %s36, 1
      %s38 = scalar_select %p35, %s36, %s37
      %p41 = pneg %p35
      %p42 = scmp.eq.s32.totalorder %s12, 1
      %p43 = por %p41, %p42
      %p44 = scmp.ne.s32.totalorder %s36, %s39
      %p45 = scmp.eq.s32.totalorder %s12, 0
      %p46 = por %p44, %p45
      %p47 = scmp.ne.s32.totalorder %s36, %s39
      %p48 = scmp.eq.s32.totalorder %s17, 1
      %p49 = por %p47, %p48
      %p50 = scmp.ne.s32.totalorder %s39, %s40
      %p51 = scmp.eq.s32.totalorder %s17, 0
      %p52 = por %p50, %p51
      %p53 = scmp.ne.s32.totalorder %s39, %s40
      %p54 = scmp.eq.s32.totalorder %s18, 1
      %p55 = por %p53, %p54
      %p57 = scmp.ne.s32.totalorder %s40, %s56
      %p58 = scmp.eq.s32.totalorder %s18, 0
      %p59 = por %p57, %p58
      %s61 = sadd.s32 %s60, 1
      %p64 = scmp.eq.s32.totalorder %s12, 1
      %p65 = scmp.ne.s32.totalorder %s60, %s62
      %p66 = scmp.eq.s32.totalorder %s12, 0
      %p67 = por %p65, %p66
      %p68 = scmp.ne.s32.totalorder %s60, %s62
      %p69 = scmp.eq.s32.totalorder %s17, 1
      %p70 = por %p68, %p69
      %p71 = scmp.ne.s32.totalorder %s62, %s63
      %p72 = scmp.eq.s32.totalorder %s17, 0
      %p73 = por %p71, %p72
      %p74 = scmp.ne.s32.totalorder %s62, %s63
      %p75 = scmp.eq.s32.totalorder %s18, 1
      %p76 = por %p74, %p75
      %p78 = scmp.ne.s32.totalorder %s63, %s77
      %p79 = scmp.eq.s32.totalorder %s18, 0
      %p80 = por %p78, %p79
      %s82 = sadd.s32 %s81, 1
      %p85 = scmp.eq.s32.totalorder %s12, 1
      %p86 = scmp.ne.s32.totalorder %s81, %s83
      %p87 = scmp.eq.s32.totalorder %s12, 0
      %p88 = por %p86, %p87
      %p89 = scmp.ne.s32.totalorder %s81, %s83
      %p90 = scmp.eq.s32.totalorder %s17, 1
      %p91 = por %p89, %p90
      %p92 = scmp.ne.s32.totalorder %s83, %s84
      %p93 = scmp.eq.s32.totalorder %s17, 0
      %p94 = por %p92, %p93
      %p95 = scmp.ne.s32.totalorder %s83, %s84
      %p96 = scmp.eq.s32.totalorder %s18, 1
      %p97 = por %p95, %p96
      %p99 = scmp.ne.s32.totalorder %s84, %s98
      %p100 = scmp.eq.s32.totalorder %s18, 0
      %p101 = por %p99, %p100
      %s102 = ssub.s32 %s19, %s31
      %s103 = ssub.s32 %s20, %s27
      %s104 = sor.u32 %s102, %s103
      %p105 = scmp.eq.s32.totalorder %s104, 0
      %s107 = sadd.s32 %s106, 1
      %s108 = scalar_select %p105, %s106, %s107
      %p111 = pneg %p105
      %p112 = scmp.eq.s32.totalorder %s12, 1
      %p113 = por %p111, %p112
      %p114 = scmp.ne.s32.totalorder %s106, %s109
      %p115 = scmp.eq.s32.totalorder %s12, 0
      %p116 = por %p114, %p115
      %p117 = scmp.ne.s32.totalorder %s106, %s109
      %p118 = scmp.eq.s32.totalorder %s17, 1
      %p119 = por %p117, %p118
      %p120 = scmp.ne.s32.totalorder %s109, %s110
      %p121 = scmp.eq.s32.totalorder %s17, 0
      %p122 = por %p120, %p121
      %p123 = scmp.ne.s32.totalorder %s109, %s110
      %p124 = scmp.eq.s32.totalorder %s18, 1
      %p125 = por %p123, %p124
      %p127 = scmp.ne.s32.totalorder %s110, %s126
      %p128 = scmp.eq.s32.totalorder %s18, 0
      %p129 = por %p127, %p128
      %p130 = scmp.le.s32.totalorder 1, %s12
      %p131 = scmp.lt.s32.totalorder %s12, 3
      %p132 = pnand %p130, %p131
      %p133 = pneg %p132
      // Predicated region
      $region9: #{tpu_custom_call.1} parent=5 // pred_check
        _
      $region10: #{tpu_custom_call.1} parent=5 // pred_check_branch
        %135 = sbr.rel (%p132) target = $region12
      $region11: #{tpu_custom_call.1} parent=5 // pred_region
        %s136 = ssub.s32 %s12, 1
        // Predicated region
        $region13: #{tpu_custom_call.1} parent=11 // pred_check
          %p137 = pneg %p73
        $region14: #{tpu_custom_call.1} parent=11 // pred_check_branch
          %139 = sbr.rel (%p137) target = $region16
        $region15: #{tpu_custom_call.1} parent=11 // pred_region
          _
        $region16: #{tpu_custom_call.1} parent=11 // pred_fallthru
          _
        // Predicated region
        $region17: #{tpu_custom_call.1} parent=11 // pred_check
          %p140 = pneg %p94
        $region18: #{tpu_custom_call.1} parent=11 // pred_check_branch
          %142 = sbr.rel (%p140) target = $region20
        $region19: #{tpu_custom_call.1} parent=11 // pred_region
          _
        $region20: #{tpu_custom_call.1} parent=11 // pred_fallthru
          _
      $region12: #{tpu_custom_call.1} parent=5 // pred_fallthru
        _
      %p143 = scmp.lt.s32.totalorder %s12, 2
      // Predicated region
      $region21: #{tpu_custom_call.1} parent=5 // pred_check
        %p144 = pneg %p143
      $region22: #{tpu_custom_call.1} parent=5 // pred_check_branch
        %146 = sbr.rel (%p144) target = $region24
      $region23: #{tpu_custom_call.1} parent=5 // pred_region
        // Predicated region
        $region25: #{tpu_custom_call.1} parent=23 // pred_check
          %p147 = pneg %p46
        $region26: #{tpu_custom_call.1} parent=23 // pred_check_branch
          %149 = sbr.rel (%p147) target = $region28
        $region27: #{tpu_custom_call.1} parent=23 // pred_region
          %s150 = sand.u32 %s36, 1
          %s151 = scalar_lea.sflag [#allocation3], %s150
          %s152 = sand.u32 %s36, 1
          %s153 = smul.addr %s152, 128
          %s154 = scalar_lea.vmem [#allocation2], %s153
          %s155 = smul.u32 8, %s20
          %s157 = ssub.s32 2048, 2048
          %158 = vsyncadd %s151, %s157
          %s159 = smul.addr %s155, 2
          %s160 = smul.addr %s19, 16
          %s161 = sadd.s32 %s159, %s160
          %s162 = smul.addr %s161, 128
          %s163 = scalar_lea.hbm %s0, %s162
          %s164 = sshll.u32 %s154, 4
          %s165 = int_to_ptr.vmem [resolvable:$true] %s164
          %170 = dma.hbm_to_vmem [thread:$0]  %s163, 2048, %s165, %s151, 128, 128, 8
        $region28: #{tpu_custom_call.1} parent=23 // pred_fallthru
          _
      $region24: #{tpu_custom_call.1} parent=5 // pred_fallthru
        _
      %p171 = scmp.le.s32.totalorder 1, %s12
      %p172 = scmp.lt.s32.totalorder %s12, 3
      %p173 = pnand %p171, %p172
      %p174 = pneg %p173
      // Predicated region
      $region29: #{tpu_custom_call.1} parent=5 // pred_check
        _
      $region30: #{tpu_custom_call.1} parent=5 // pred_check_branch
        %176 = sbr.rel (%p173) target = $region32
      $region31: #{tpu_custom_call.1} parent=5 // pred_region
        %s177 = ssub.s32 %s12, 1
        %s178 = sand.u32 %s39, 1
        %s179 = scalar_lea.sflag [#allocation3], %s178
        %s180 = sand.u32 %s39, 1
        %s181 = smul.addr %s180, 128
        %s182 = scalar_lea.vmem [#allocation2], %s181
        // Predicated region
        $region33: #{tpu_custom_call.1} parent=31 // pred_check
          %p183 = pneg %p52
        $region34: #{tpu_custom_call.1} parent=31 // pred_check_branch
          %185 = sbr.rel (%p183) target = $region36
        $region35: #{tpu_custom_call.1} parent=31 // pred_region
          %186 = dma.done %s179, 2048
        $region36: #{tpu_custom_call.1} parent=31 // pred_fallthru
          _
        %s187 = sand.u32 %s39, 1
        %s188 = scalar_lea.sflag [#allocation3], %s187
        %s189 = sand.u32 %s39, 1
        %s190 = smul.addr %s189, 128
        %s191 = scalar_lea.vmem [#allocation2], %s190
        %p192 = pneg %p52
        %p193 = pneg %p49
        %p194 = pneg %p73
        %p195 = pneg %p70
        %p196 = pneg %p94
        %p197 = pneg %p91
        %p198 = pneg %p122
        %p199 = pneg %p119
        %s200 = smul.u32 8, %s22
        %p201 = scmp.lt.s32.totalorder %s21, 1
        %s202 = scalar_select %p201, %s21, 1
        %p203 = scmp.lt.s32.totalorder %s200, 7
        %s204 = scalar_select %p203, %s200, 7
        %s205 = smul.addr %s204, 2
        %s206 = smul.addr %s202, 16
        %s207 = sadd.s32 %s205, %s206
        %s208 = smul.addr %s207, 8
        %s209 = scalar_lea.vmem %s3, %s208
        %s210 = smul.u32 8, %s22
        %s211 = smul.u32 8, %s22
        %p212 = scmp.lt.s32.totalorder %s21, 1
        %s213 = scalar_select %p212, %s21, 1
        %p214 = scmp.lt.s32.totalorder %s211, 7
        %s215 = scalar_select %p214, %s211, 7
        %s216 = smul.addr %s215, 2
        %s217 = smul.addr %s213, 16
        %s218 = sadd.s32 %s216, %s217
        %s219 = smul.addr %s218, 8
        %s220 = scalar_lea.vmem %s3, %s219
        %s221 = smul.u32 8, %s22
        %v222 = vld [vmem:[%s182] sm:$0xff]
        %v223 = vld [vmem:[%s182 + $0x8] sm:$0xff]
        %v224 = vld [vmem:[%s182 + $0x10] sm:$0xff]
        %v225 = vld [vmem:[%s182 + $0x18] sm:$0xff]
        %v226 = vld [vmem:[%s182 + $0x20] sm:$0xff]
        %v227 = vld [vmem:[%s182 + $0x28] sm:$0xff]
        %v228 = vld [vmem:[%s182 + $0x30] sm:$0xff]
        %v229 = vld [vmem:[%s182 + $0x38] sm:$0xff]
        %v230 = vld [vmem:[%s182 + $0x40] sm:$0xff]
        %v231 = vld [vmem:[%s182 + $0x48] sm:$0xff]
        %v232 = vld [vmem:[%s182 + $0x50] sm:$0xff]
        %v233 = vld [vmem:[%s182 + $0x58] sm:$0xff]
        %v234 = vld [vmem:[%s182 + $0x60] sm:$0xff]
        %v235 = vld [vmem:[%s182 + $0x68] sm:$0xff]
        %v236 = vld [vmem:[%s182 + $0x70] sm:$0xff]
        %v237 = vld [vmem:[%s182 + $0x78] sm:$0xff]
        %v238 = vld [vmem:[%s1] sm:$0xff]
        %v239 = vld [vmem:[%s1 + $0x8] sm:$0xff]
        %v240 = vld [vmem:[%s1 + $0x10] sm:$0xff]
        %v241 = vld [vmem:[%s1 + $0x18] sm:$0xff]
        %v242 = vld [vmem:[%s2] sm:$0x1]
        %v244 = vlaneseq
        %v245 = vshrl.u32 %v244, 7
        %v246 = vsub.s32 0, %v245
        %v247 = vrot.slane %v242, %v246
        %vm249 = vcmask 261120
        %v251 = vsel %vm249, %v222, 0
        %v254 = vsel %vm249, %v223, 0
        %v257 = vsel %vm249, %v224, 0
        %v260 = vsel %vm249, %v225, 0
        %v263 = vsel %vm249, %v226, 0
        %v266 = vsel %vm249, %v227, 0
        %v269 = vsel %vm249, %v228, 0
        %v272 = vsel %vm249, %v229, 0
        %v275 = vsel %vm249, %v230, 0
        %v278 = vsel %vm249, %v231, 0
        %v281 = vsel %vm249, %v232, 0
        %v284 = vsel %vm249, %v233, 0
        %v287 = vsel %vm249, %v234, 0
        %v290 = vsel %vm249, %v235, 0
        %v293 = vsel %vm249, %v236, 0
        %v296 = vsel %vm249, %v237, 0
        %298 = vmatprep.subr.mxu0 0.0
        %299 = vmatpush1.msra.mxu0 %v238
        %300 = vmatprep.subr.mxu0 0.0
        %301 = vmatpush1.msra.mxu0 %v239
        %302 = vmatprep.subr.mxu0 0.0
        %303 = vmatpush1.msra.mxu0 %v240
        %304 = vmatprep.subr.mxu0 0.0
        %305 = vmatpush1.msra.mxu0 %v241
        %306 = vmatprep.subr.mxu0 0.0
        %307 = vmatpush1.msra.mxu0 0.0
        %308 = vmatprep.subr.mxu0 0.0
        %309 = vmatpush1.msra.mxu0 0.0
        %310 = vmatprep.subr.mxu0 0.0
        %311 = vmatpush1.msra.mxu0 0.0
        %312 = vmatprep.subr.mxu0 0.0
        %313 = vmatpush1.msra.mxu0 0.0
        %314 = vmatprep.subr.mxu0 0.0
        %315 = vmatpush1.msra.mxu0 0.0
        %316 = vmatprep.subr.mxu0 0.0
        %317 = vmatpush1.msra.mxu0 0.0
        %318 = vmatprep.subr.mxu0 0.0
        %319 = vmatpush1.msra.mxu0 0.0
        %320 = vmatprep.subr.mxu0 0.0
        %321 = vmatpush1.msra.mxu0 0.0
        %322 = vmatprep.subr.mxu0 0.0
        %323 = vmatpush1.msra.mxu0 0.0
        %324 = vmatprep.subr.mxu0 0.0
        %325 = vmatpush1.msra.mxu0 0.0
        %326 = vmatprep.subr.mxu0 0.0
        %327 = vmatpush1.msra.mxu0 0.0
        %328 = vmatprep.subr.mxu0 0.0
        %329 = vmatpush1.msra.mxu0 0.0
        %330 = vmatprep.subr.mxu0 0.0
        %331 = vmatpush1.msra.mxu0 0.0
        %332 = vmatprep.subr.mxu0 0.0
        %333 = vmatpush1.msra.mxu0 0.0
        %334 = vmatprep.subr.mxu0 0.0
        %335 = vmatpush1.msra.mxu0 0.0
        %336 = vmatprep.subr.mxu0 0.0
        %337 = vmatpush1.msra.mxu0 0.0
        %338 = vmatprep.subr.mxu0 0.0
        %339 = vmatpush1.msra.mxu0 0.0
        %340 = vmatprep.subr.mxu0 0.0
        %341 = vmatpush1.msra.mxu0 0.0
        %342 = vmatprep.subr.mxu0 0.0
        %343 = vmatpush1.msra.mxu0 0.0
        %344 = vmatprep.subr.mxu0 0.0
        %345 = vmatpush1.msra.mxu0 0.0
        %346 = vmatprep.subr.mxu0 0.0
        %347 = vmatpush1.msra.mxu0 0.0
        %348 = vmatprep.subr.mxu0 0.0
        %349 = vmatpush1.msra.mxu0 0.0
        %350 = vmatprep.subr.mxu0 0.0
        %351 = vmatpush1.msra.mxu0 0.0
        %352 = vmatprep.subr.mxu0 0.0
        %353 = vmatpush1.msra.mxu0 0.0
        %354 = vmatprep.subr.mxu0 0.0
        %355 = vmatpush1.msra.mxu0 0.0
        %356 = vmatprep.subr.mxu0 0.0
        %357 = vmatpush1.msra.mxu0 0.0
        %358 = vmatprep.subr.mxu0 0.0
        %359 = vmatpush1.msra.mxu0 0.0
        %360 = vmatprep.subr.mxu0 0.0
        %361 = vmatpush1.msra.mxu0 0.0
        %362 = vmatprep.mubr.f32.mxu0 0.0
        %363 = vmatmul.mubr.f32.gmra.mrb[0].mxu0 %v251
        %v364 = vpop.f32.mrb[0].mxu0
        %v365 = vadd.f32 %v247, %v364
        %v366 = vpop.f32.mrb[0].mxu0
        %367 = vmatprep.mubr.f32.mxu0 0.0
        %368 = vmatmul.mubr.f32.gmra.mrb[0].mxu0 %v254
        %v369 = vpop.f32.mrb[0].mxu0
        %v370 = vadd.f32 %v247, %v369
        %v371 = vpop.f32.mrb[0].mxu0
        %372 = vmatprep.mubr.f32.mxu0 0.0
        %373 = vmatmul.mubr.f32.gmra.mrb[0].mxu0 %v257
        %v374 = vpop.f32.mrb[0].mxu0
        %v375 = vadd.f32 %v247, %v374
        %v376 = vpop.f32.mrb[0].mxu0
        %377 = vmatprep.mubr.f32.mxu0 0.0
        %378 = vmatmul.mubr.f32.gmra.mrb[0].mxu0 %v260
        %v379 = vpop.f32.mrb[0].mxu0
        %v380 = vadd.f32 %v247, %v379
        %v381 = vpop.f32.mrb[0].mxu0
        %382 = vmatprep.mubr.f32.mxu0 0.0
        %383 = vmatmul.mubr.f32.gmra.mrb[0].mxu0 %v263
        %v384 = vpop.f32.mrb[0].mxu0
        %v385 = vadd.f32 %v247, %v384
        %v386 = vpop.f32.mrb[0].mxu0
        %387 = vmatprep.mubr.f32.mxu0 0.0
        %388 = vmatmul.mubr.f32.gmra.mrb[0].mxu0 %v266
        %v389 = vpop.f32.mrb[0].mxu0
        %v390 = vadd.f32 %v247, %v389
        %v391 = vpop.f32.mrb[0].mxu0
        %392 = vmatprep.mubr.f32.mxu0 0.0
        %393 = vmatmul.mubr.f32.gmra.mrb[0].mxu0 %v269
        %v394 = vpop.f32.mrb[0].mxu0
        %v395 = vadd.f32 %v247, %v394
        %v396 = vpop.f32.mrb[0].mxu0
        %397 = vmatprep.mubr.f32.mxu0 0.0
        %398 = vmatmul.mubr.f32.gmra.mrb[0].mxu0 %v272
        %v399 = vpop.f32.mrb[0].mxu0
        %v400 = vadd.f32 %v247, %v399
        %v401 = vpop.f32.mrb[0].mxu0
        %402 = vmatprep.mubr.f32.mxu0 0.0
        %403 = vmatmul.mubr.f32.gmra.mrb[0].mxu0 %v275
        %v404 = vpop.f32.mrb[0].mxu0
        %v405 = vadd.f32 %v247, %v404
        %v406 = vpop.f32.mrb[0].mxu0
        %407 = vmatprep.mubr.f32.mxu0 0.0
        %408 = vmatmul.mubr.f32.gmra.mrb[0].mxu0 %v278
        %v409 = vpop.f32.mrb[0].mxu0
        %v410 = vadd.f32 %v247, %v409
        %v411 = vpop.f32.mrb[0].mxu0
        %412 = vmatprep.mubr.f32.mxu0 0.0
        %413 = vmatmul.mubr.f32.gmra.mrb[0].mxu0 %v281
        %v414 = vpop.f32.mrb[0].mxu0
        %v415 = vadd.f32 %v247, %v414
        %v416 = vpop.f32.mrb[0].mxu0
        %417 = vmatprep.mubr.f32.mxu0 0.0
        %418 = vmatmul.mubr.f32.gmra.mrb[0].mxu0 %v284
        %v419 = vpop.f32.mrb[0].mxu0
        %v420 = vadd.f32 %v247, %v419
        %v421 = vpop.f32.mrb[0].mxu0
        %422 = vmatprep.mubr.f32.mxu0 0.0
        %423 = vmatmul.mubr.f32.gmra.mrb[0].mxu0 %v287
        %v424 = vpop.f32.mrb[0].mxu0
        %v425 = vadd.f32 %v247, %v424
        %v426 = vpop.f32.mrb[0].mxu0
        %427 = vmatprep.mubr.f32.mxu0 0.0
        %428 = vmatmul.mubr.f32.gmra.mrb[0].mxu0 %v290
        %v429 = vpop.f32.mrb[0].mxu0
        %v430 = vadd.f32 %v247, %v429
        %v431 = vpop.f32.mrb[0].mxu0
        %432 = vmatprep.mubr.f32.mxu0 0.0
        %433 = vmatmul.mubr.f32.gmra.mrb[0].mxu0 %v293
        %v434 = vpop.f32.mrb[0].mxu0
        %v435 = vadd.f32 %v247, %v434
        %v436 = vpop.f32.mrb[0].mxu0
        %437 = vmatprep.mubr.f32.mxu0 0.0
        %438 = vmatmul.mubr.f32.gmra.mrb[0].mxu0 %v296
        %v439 = vpop.f32.mrb[0].mxu0
        %v440 = vadd.f32 %v247, %v439
        %v441 = vpop.f32.mrb[0].mxu0
        %442 = vdwg.mxu0
        %445 = vrot.lane.b32.xlu0 %v365, 124
        %v446 = vpop.permute.xlu0 %445
        %447 = vrot.lane.b32.xlu0 %v370, 124
        %v448 = vpop.permute.xlu0 %447
        %vm449 = vcmask 31744
        %v450 = vsel %vm449, %v365, 0
        %v452 = vsel %vm449, %v370, 0
        %v454 = vsel %vm449, %v446, 0
        %v456 = vsel %vm449, %v448, 0
        %458 = vmatprep.subr.mxu0 0.0
        %459 = vmatpush1.xpose.msra.mxu0 %v454
        %460 = vmatprep.subr.mxu0 0.0
        %461 = vmatpush1.xpose.msra.mxu0 %v456
        %462 = vmatprep.subr.mxu0 0.0
        %463 = vmatpush1.xpose.msra.mxu0 0.0
        %464 = vmatprep.subr.mxu0 0.0
        %465 = vmatpush1.xpose.msra.mxu0 0.0
        %466 = vmatprep.subr.mxu0 0.0
        %467 = vmatpush1.xpose.msra.mxu0 0.0
        %468 = vmatprep.subr.mxu0 0.0
        %469 = vmatpush1.xpose.msra.mxu0 0.0
        %470 = vmatprep.subr.mxu0 0.0
        %471 = vmatpush1.xpose.msra.mxu0 0.0
        %472 = vmatprep.subr.mxu0 0.0
        %473 = vmatpush1.xpose.msra.mxu0 0.0
        %474 = vmatprep.subr.mxu0 0.0
        %475 = vmatpush1.xpose.msra.mxu0 0.0
        %476 = vmatprep.subr.mxu0 0.0
        %477 = vmatpush1.xpose.msra.mxu0 0.0
        %478 = vmatprep.subr.mxu0 0.0
        %479 = vmatpush1.xpose.msra.mxu0 0.0
        %480 = vmatprep.subr.mxu0 0.0
        %481 = vmatpush1.xpose.msra.mxu0 0.0
        %482 = vmatprep.subr.mxu0 0.0
        %483 = vmatpush1.xpose.msra.mxu0 0.0
        %484 = vmatprep.subr.mxu0 0.0
        %485 = vmatpush1.xpose.msra.mxu0 0.0
        %486 = vmatprep.subr.mxu0 0.0
        %487 = vmatpush1.xpose.msra.mxu0 0.0
        %488 = vmatprep.subr.mxu0 0.0
        %489 = vmatpush1.xpose.msra.mxu0 0.0
        %490 = vmatprep.subr.mxu0 0.0
        %491 = vmatpush1.xpose.msra.mxu0 0.0
        %492 = vmatprep.subr.mxu0 0.0
        %493 = vmatpush1.xpose.msra.mxu0 0.0
        %494 = vmatprep.subr.mxu0 0.0
        %495 = vmatpush1.xpose.msra.mxu0 0.0
        %496 = vmatprep.subr.mxu0 0.0
        %497 = vmatpush1.xpose.msra.mxu0 0.0
        %498 = vmatprep.subr.mxu0 0.0
        %499 = vmatpush1.xpose.msra.mxu0 0.0
        %500 = vmatprep.subr.mxu0 0.0
        %501 = vmatpush1.xpose.msra.mxu0 0.0
        %502 = vmatprep.subr.mxu0 0.0
        %503 = vmatpush1.xpose.msra.mxu0 0.0
        %504 = vmatprep.subr.mxu0 0.0
        %505 = vmatpush1.xpose.msra.mxu0 0.0
        %506 = vmatprep.subr.mxu0 0.0
        %507 = vmatpush1.xpose.msra.mxu0 0.0
        %508 = vmatprep.subr.mxu0 0.0
        %509 = vmatpush1.xpose.msra.mxu0 0.0
        %510 = vmatprep.subr.mxu0 0.0
        %511 = vmatpush1.xpose.msra.mxu0 0.0
        %512 = vmatprep.subr.mxu0 0.0
        %513 = vmatpush1.xpose.msra.mxu0 0.0
        %514 = vmatprep.subr.mxu0 0.0
        %515 = vmatpush1.xpose.msra.mxu0 0.0
        %516 = vmatprep.subr.mxu0 0.0
        %517 = vmatpush1.xpose.msra.mxu0 0.0
        %518 = vmatprep.subr.mxu0 0.0
        %519 = vmatpush1.xpose.msra.mxu0 0.0
        %520 = vmatprep.subr.mxu0 0.0
        %521 = vmatpush1.xpose.msra.mxu0 0.0
        %522 = vmatprep.mubr.f32.mxu0 0.0
        %523 = vmatmul.mubr.f32.gmra.mrb[0].mxu0 %v450
        %v524 = vpop.f32.mrb[0].mxu0
        %v525 = vadd.f32 0.0, %v524
        %v526 = vpop.f32.mrb[0].mxu0
        %527 = vmatprep.mubr.f32.mxu0 0.0
        %528 = vmatmul.mubr.f32.gmra.mrb[0].mxu0 %v452
        %v529 = vpop.f32.mrb[0].mxu0
        %v530 = vadd.f32 0.0, %v529
        %v531 = vpop.f32.mrb[0].mxu0
        %532 = vdwg.mxu0
        %535 = vrot.lane.b32.xlu0 %v375, 124
        %v536 = vpop.permute.xlu0 %535
        %537 = vrot.lane.b32.xlu0 %v380, 124
        %v538 = vpop.permute.xlu0 %537
        %v539 = vsel %vm449, %v375, 0
        %v541 = vsel %vm449, %v380, 0
        %v543 = vsel %vm449, %v536, 0
        %v545 = vsel %vm449, %v538, 0
        %547 = vmatprep.subr.mxu0 0.0
        %548 = vmatpush1.xpose.msra.mxu0 %v543
        %549 = vmatprep.subr.mxu0 0.0
        %550 = vmatpush1.xpose.msra.mxu0 %v545
        %551 = vmatprep.subr.mxu0 0.0
        %552 = vmatpush1.xpose.msra.mxu0 0.0
        %553 = vmatprep.subr.mxu0 0.0
        %554 = vmatpush1.xpose.msra.mxu0 0.0
        %555 = vmatprep.subr.mxu0 0.0
        %556 = vmatpush1.xpose.msra.mxu0 0.0
        %557 = vmatprep.subr.mxu0 0.0
        %558 = vmatpush1.xpose.msra.mxu0 0.0
        %559 = vmatprep.subr.mxu0 0.0
        %560 = vmatpush1.xpose.msra.mxu0 0.0
        %561 = vmatprep.subr.mxu0 0.0
        %562 = vmatpush1.xpose.msra.mxu0 0.0
        %563 = vmatprep.subr.mxu0 0.0
        %564 = vmatpush1.xpose.msra.mxu0 0.0
        %565 = vmatprep.subr.mxu0 0.0
        %566 = vmatpush1.xpose.msra.mxu0 0.0
        %567 = vmatprep.subr.mxu0 0.0
        %568 = vmatpush1.xpose.msra.mxu0 0.0
        %569 = vmatprep.subr.mxu0 0.0
        %570 = vmatpush1.xpose.msra.mxu0 0.0
        %571 = vmatprep.subr.mxu0 0.0
        %572 = vmatpush1.xpose.msra.mxu0 0.0
        %573 = vmatprep.subr.mxu0 0.0
        %574 = vmatpush1.xpose.msra.mxu0 0.0
        %575 = vmatprep.subr.mxu0 0.0
        %576 = vmatpush1.xpose.msra.mxu0 0.0
        %577 = vmatprep.subr.mxu0 0.0
        %578 = vmatpush1.xpose.msra.mxu0 0.0
        %579 = vmatprep.subr.mxu0 0.0
        %580 = vmatpush1.xpose.msra.mxu0 0.0
        %581 = vmatprep.subr.mxu0 0.0
        %582 = vmatpush1.xpose.msra.mxu0 0.0
        %583 = vmatprep.subr.mxu0 0.0
        %584 = vmatpush1.xpose.msra.mxu0 0.0
        %585 = vmatprep.subr.mxu0 0.0
        %586 = vmatpush1.xpose.msra.mxu0 0.0
        %587 = vmatprep.subr.mxu0 0.0
        %588 = vmatpush1.xpose.msra.mxu0 0.0
        %589 = vmatprep.subr.mxu0 0.0
        %590 = vmatpush1.xpose.msra.mxu0 0.0
        %591 = vmatprep.subr.mxu0 0.0
        %592 = vmatpush1.xpose.msra.mxu0 0.0
        %593 = vmatprep.subr.mxu0 0.0
        %594 = vmatpush1.xpose.msra.mxu0 0.0
        %595 = vmatprep.subr.mxu0 0.0
        %596 = vmatpush1.xpose.msra.mxu0 0.0
        %597 = vmatprep.subr.mxu0 0.0
        %598 = vmatpush1.xpose.msra.mxu0 0.0
        %599 = vmatprep.subr.mxu0 0.0
        %600 = vmatpush1.xpose.msra.mxu0 0.0
        %601 = vmatprep.subr.mxu0 0.0
        %602 = vmatpush1.xpose.msra.mxu0 0.0
        %603 = vmatprep.subr.mxu0 0.0
        %604 = vmatpush1.xpose.msra.mxu0 0.0
        %605 = vmatprep.subr.mxu0 0.0
        %606 = vmatpush1.xpose.msra.mxu0 0.0
        %607 = vmatprep.subr.mxu0 0.0
        %608 = vmatpush1.xpose.msra.mxu0 0.0
        %609 = vmatprep.subr.mxu0 0.0
        %610 = vmatpush1.xpose.msra.mxu0 0.0
        %611 = vmatprep.mubr.f32.mxu0 0.0
        %612 = vmatmul.mubr.f32.gmra.mrb[0].mxu0 %v539
        %v613 = vpop.f32.mrb[0].mxu0
        %v614 = vadd.f32 0.0, %v613
        %v615 = vpop.f32.mrb[0].mxu0
        %616 = vmatprep.mubr.f32.mxu0 0.0
        %617 = vmatmul.mubr.f32.gmra.mrb[0].mxu0 %v541
        %v618 = vpop.f32.mrb[0].mxu0
        %v619 = vadd.f32 0.0, %v618
        %v620 = vpop.f32.mrb[0].mxu0
        %621 = vdwg.mxu0
        %624 = vrot.lane.b32.xlu0 %v385, 124
        %v625 = vpop.permute.xlu0 %624
        %626 = vrot.lane.b32.xlu0 %v390, 124
        %v627 = vpop.permute.xlu0 %626
        %v628 = vsel %vm449, %v385, 0
        %v630 = vsel %vm449, %v390, 0
        %v632 = vsel %vm449, %v625, 0
        %v634 = vsel %vm449, %v627, 0
        %636 = vmatprep.subr.mxu0 0.0
        %637 = vmatpush1.xpose.msra.mxu0 %v632
        %638 = vmatprep.subr.mxu0 0.0
        %639 = vmatpush1.xpose.msra.mxu0 %v634
        %640 = vmatprep.subr.mxu0 0.0
        %641 = vmatpush1.xpose.msra.mxu0 0.0
        %642 = vmatprep.subr.mxu0 0.0
        %643 = vmatpush1.xpose.msra.mxu0 0.0
        %644 = vmatprep.subr.mxu0 0.0
        %645 = vmatpush1.xpose.msra.mxu0 0.0
        %646 = vmatprep.subr.mxu0 0.0
        %647 = vmatpush1.xpose.msra.mxu0 0.0
        %648 = vmatprep.subr.mxu0 0.0
        %649 = vmatpush1.xpose.msra.mxu0 0.0
        %650 = vmatprep.subr.mxu0 0.0
        %651 = vmatpush1.xpose.msra.mxu0 0.0
        %652 = vmatprep.subr.mxu0 0.0
        %653 = vmatpush1.xpose.msra.mxu0 0.0
        %654 = vmatprep.subr.mxu0 0.0
        %655 = vmatpush1.xpose.msra.mxu0 0.0
        %656 = vmatprep.subr.mxu0 0.0
        %657 = vmatpush1.xpose.msra.mxu0 0.0
        %658 = vmatprep.subr.mxu0 0.0
        %659 = vmatpush1.xpose.msra.mxu0 0.0
        %660 = vmatprep.subr.mxu0 0.0
        %661 = vmatpush1.xpose.msra.mxu0 0.0
        %662 = vmatprep.subr.mxu0 0.0
        %663 = vmatpush1.xpose.msra.mxu0 0.0
        %664 = vmatprep.subr.mxu0 0.0
        %665 = vmatpush1.xpose.msra.mxu0 0.0
        %666 = vmatprep.subr.mxu0 0.0
        %667 = vmatpush1.xpose.msra.mxu0 0.0
        %668 = vmatprep.subr.mxu0 0.0
        %669 = vmatpush1.xpose.msra.mxu0 0.0
        %670 = vmatprep.subr.mxu0 0.0
        %671 = vmatpush1.xpose.msra.mxu0 0.0
        %672 = vmatprep.subr.mxu0 0.0
        %673 = vmatpush1.xpose.msra.mxu0 0.0
        %674 = vmatprep.subr.mxu0 0.0
        %675 = vmatpush1.xpose.msra.mxu0 0.0
        %676 = vmatprep.subr.mxu0 0.0
        %677 = vmatpush1.xpose.msra.mxu0 0.0
        %678 = vmatprep.subr.mxu0 0.0
        %679 = vmatpush1.xpose.msra.mxu0 0.0
        %680 = vmatprep.subr.mxu0 0.0
        %681 = vmatpush1.xpose.msra.mxu0 0.0
        %682 = vmatprep.subr.mxu0 0.0
        %683 = vmatpush1.xpose.msra.mxu0 0.0
        %684 = vmatprep.subr.mxu0 0.0
        %685 = vmatpush1.xpose.msra.mxu0 0.0
        %686 = vmatprep.subr.mxu0 0.0
        %687 = vmatpush1.xpose.msra.mxu0 0.0
        %688 = vmatprep.subr.mxu0 0.0
        %689 = vmatpush1.xpose.msra.mxu0 0.0
        %690 = vmatprep.subr.mxu0 0.0
        %691 = vmatpush1.xpose.msra.mxu0 0.0
        %692 = vmatprep.subr.mxu0 0.0
        %693 = vmatpush1.xpose.msra.mxu0 0.0
        %694 = vmatprep.subr.mxu0 0.0
        %695 = vmatpush1.xpose.msra.mxu0 0.0
        %696 = vmatprep.subr.mxu0 0.0
        %697 = vmatpush1.xpose.msra.mxu0 0.0
        %698 = vmatprep.subr.mxu0 0.0
        %699 = vmatpush1.xpose.msra.mxu0 0.0
        %700 = vmatprep.mubr.f32.mxu0 0.0
        %701 = vmatmul.mubr.f32.gmra.mrb[0].mxu0 %v628
        %v702 = vpop.f32.mrb[0].mxu0
        %v703 = vadd.f32 0.0, %v702
        %v704 = vpop.f32.mrb[0].mxu0
        %705 = vmatprep.mubr.f32.mxu0 0.0
        %706 = vmatmul.mubr.f32.gmra.mrb[0].mxu0 %v630
        %v707 = vpop.f32.mrb[0].mxu0
        %v708 = vadd.f32 0.0, %v707
        %v709 = vpop.f32.mrb[0].mxu0
        %710 = vdwg.mxu0
        %713 = vrot.lane.b32.xlu0 %v395, 124
        %v714 = vpop.permute.xlu0 %713
        %715 = vrot.lane.b32.xlu0 %v400, 124
        %v716 = vpop.permute.xlu0 %715
        %v717 = vsel %vm449, %v395, 0
        %v719 = vsel %vm449, %v400, 0
        %v721 = vsel %vm449, %v714, 0
        %v723 = vsel %vm449, %v716, 0
        %725 = vmatprep.subr.mxu0 0.0
        %726 = vmatpush1.xpose.msra.mxu0 %v721
        %727 = vmatprep.subr.mxu0 0.0
        %728 = vmatpush1.xpose.msra.mxu0 %v723
        %729 = vmatprep.subr.mxu0 0.0
        %730 = vmatpush1.xpose.msra.mxu0 0.0
        %731 = vmatprep.subr.mxu0 0.0
        %732 = vmatpush1.xpose.msra.mxu0 0.0
        %733 = vmatprep.subr.mxu0 0.0
        %734 = vmatpush1.xpose.msra.mxu0 0.0
        %735 = vmatprep.subr.mxu0 0.0
        %736 = vmatpush1.xpose.msra.mxu0 0.0
        %737 = vmatprep.subr.mxu0 0.0
        %738 = vmatpush1.xpose.msra.mxu0 0.0
        %739 = vmatprep.subr.mxu0 0.0
        %740 = vmatpush1.xpose.msra.mxu0 0.0
        %741 = vmatprep.subr.mxu0 0.0
        %742 = vmatpush1.xpose.msra.mxu0 0.0
        %743 = vmatprep.subr.mxu0 0.0
        %744 = vmatpush1.xpose.msra.mxu0 0.0
        %745 = vmatprep.subr.mxu0 0.0
        %746 = vmatpush1.xpose.msra.mxu0 0.0
        %747 = vmatprep.subr.mxu0 0.0
        %748 = vmatpush1.xpose.msra.mxu0 0.0
        %749 = vmatprep.subr.mxu0 0.0
        %750 = vmatpush1.xpose.msra.mxu0 0.0
        %751 = vmatprep.subr.mxu0 0.0
        %752 = vmatpush1.xpose.msra.mxu0 0.0
        %753 = vmatprep.subr.mxu0 0.0
        %754 = vmatpush1.xpose.msra.mxu0 0.0
        %755 = vmatprep.subr.mxu0 0.0
        %756 = vmatpush1.xpose.msra.mxu0 0.0
        %757 = vmatprep.subr.mxu0 0.0
        %758 = vmatpush1.xpose.msra.mxu0 0.0
        %759 = vmatprep.subr.mxu0 0.0
        %760 = vmatpush1.xpose.msra.mxu0 0.0
        %761 = vmatprep.subr.mxu0 0.0
        %762 = vmatpush1.xpose.msra.mxu0 0.0
        %763 = vmatprep.subr.mxu0 0.0
        %764 = vmatpush1.xpose.msra.mxu0 0.0
        %765 = vmatprep.subr.mxu0 0.0
        %766 = vmatpush1.xpose.msra.mxu0 0.0
        %767 = vmatprep.subr.mxu0 0.0
        %768 = vmatpush1.xpose.msra.mxu0 0.0
        %769 = vmatprep.subr.mxu0 0.0
        %770 = vmatpush1.xpose.msra.mxu0 0.0
        %771 = vmatprep.subr.mxu0 0.0
        %772 = vmatpush1.xpose.msra.mxu0 0.0
        %773 = vmatprep.subr.mxu0 0.0
        %774 = vmatpush1.xpose.msra.mxu0 0.0
        %775 = vmatprep.subr.mxu0 0.0
        %776 = vmatpush1.xpose.msra.mxu0 0.0
        %777 = vmatprep.subr.mxu0 0.0
        %778 = vmatpush1.xpose.msra.mxu0 0.0
        %779 = vmatprep.subr.mxu0 0.0
        %780 = vmatpush1.xpose.msra.mxu0 0.0
        %781 = vmatprep.subr.mxu0 0.0
        %782 = vmatpush1.xpose.msra.mxu0 0.0
        %783 = vmatprep.subr.mxu0 0.0
        %784 = vmatpush1.xpose.msra.mxu0 0.0
        %785 = vmatprep.subr.mxu0 0.0
        %786 = vmatpush1.xpose.msra.mxu0 0.0
        %787 = vmatprep.subr.mxu0 0.0
        %788 = vmatpush1.xpose.msra.mxu0 0.0
        %789 = vmatprep.mubr.f32.mxu0 0.0
        %790 = vmatmul.mubr.f32.gmra.mrb[0].mxu0 %v717
        %v791 = vpop.f32.mrb[0].mxu0
        %v792 = vadd.f32 0.0, %v791
        %v793 = vpop.f32.mrb[0].mxu0
        %794 = vmatprep.mubr.f32.mxu0 0.0
        %795 = vmatmul.mubr.f32.gmra.mrb[0].mxu0 %v719
        %v796 = vpop.f32.mrb[0].mxu0
        %v797 = vadd.f32 0.0, %v796
        %v798 = vpop.f32.mrb[0].mxu0
        %799 = vdwg.mxu0
        %802 = vrot.lane.b32.xlu0 %v405, 124
        %v803 = vpop.permute.xlu0 %802
        %804 = vrot.lane.b32.xlu0 %v410, 124
        %v805 = vpop.permute.xlu0 %804
        %v806 = vsel %vm449, %v405, 0
        %v808 = vsel %vm449, %v410, 0
        %v810 = vsel %vm449, %v803, 0
        %v812 = vsel %vm449, %v805, 0
        %814 = vmatprep.subr.mxu0 0.0
        %815 = vmatpush1.xpose.msra.mxu0 %v810
        %816 = vmatprep.subr.mxu0 0.0
        %817 = vmatpush1.xpose.msra.mxu0 %v812
        %818 = vmatprep.subr.mxu0 0.0
        %819 = vmatpush1.xpose.msra.mxu0 0.0
        %820 = vmatprep.subr.mxu0 0.0
        %821 = vmatpush1.xpose.msra.mxu0 0.0
        %822 = vmatprep.subr.mxu0 0.0
        %823 = vmatpush1.xpose.msra.mxu0 0.0
        %824 = vmatprep.subr.mxu0 0.0
        %825 = vmatpush1.xpose.msra.mxu0 0.0
        %826 = vmatprep.subr.mxu0 0.0
        %827 = vmatpush1.xpose.msra.mxu0 0.0
        %828 = vmatprep.subr.mxu0 0.0
        %829 = vmatpush1.xpose.msra.mxu0 0.0
        %830 = vmatprep.subr.mxu0 0.0
        %831 = vmatpush1.xpose.msra.mxu0 0.0
        %832 = vmatprep.subr.mxu0 0.0
        %833 = vmatpush1.xpose.msra.mxu0 0.0
        %834 = vmatprep.subr.mxu0 0.0
        %835 = vmatpush1.xpose.msra.mxu0 0.0
        %836 = vmatprep.subr.mxu0 0.0
        %837 = vmatpush1.xpose.msra.mxu0 0.0
        %838 = vmatprep.subr.mxu0 0.0
        %839 = vmatpush1.xpose.msra.mxu0 0.0
        %840 = vmatprep.subr.mxu0 0.0
        %841 = vmatpush1.xpose.msra.mxu0 0.0
        %842 = vmatprep.subr.mxu0 0.0
        %843 = vmatpush1.xpose.msra.mxu0 0.0
        %844 = vmatprep.subr.mxu0 0.0
        %845 = vmatpush1.xpose.msra.mxu0 0.0
        %846 = vmatprep.subr.mxu0 0.0
        %847 = vmatpush1.xpose.msra.mxu0 0.0
        %848 = vmatprep.subr.mxu0 0.0
        %849 = vmatpush1.xpose.msra.mxu0 0.0
        %850 = vmatprep.subr.mxu0 0.0
        %851 = vmatpush1.xpose.msra.mxu0 0.0
        %852 = vmatprep.subr.mxu0 0.0
        %853 = vmatpush1.xpose.msra.mxu0 0.0
        %854 = vmatprep.subr.mxu0 0.0
        %855 = vmatpush1.xpose.msra.mxu0 0.0
        %856 = vmatprep.subr.mxu0 0.0
        %857 = vmatpush1.xpose.msra.mxu0 0.0
        %858 = vmatprep.subr.mxu0 0.0
        %859 = vmatpush1.xpose.msra.mxu0 0.0
        %860 = vmatprep.subr.mxu0 0.0
        %861 = vmatpush1.xpose.msra.mxu0 0.0
        %862 = vmatprep.subr.mxu0 0.0
        %863 = vmatpush1.xpose.msra.mxu0 0.0
        %864 = vmatprep.subr.mxu0 0.0
        %865 = vmatpush1.xpose.msra.mxu0 0.0
        %866 = vmatprep.subr.mxu0 0.0
        %867 = vmatpush1.xpose.msra.mxu0 0.0
        %868 = vmatprep.subr.mxu0 0.0
        %869 = vmatpush1.xpose.msra.mxu0 0.0
        %870 = vmatprep.subr.mxu0 0.0
        %871 = vmatpush1.xpose.msra.mxu0 0.0
        %872 = vmatprep.subr.mxu0 0.0
        %873 = vmatpush1.xpose.msra.mxu0 0.0
        %874 = vmatprep.subr.mxu0 0.0
        %875 = vmatpush1.xpose.msra.mxu0 0.0
        %876 = vmatprep.subr.mxu0 0.0
        %877 = vmatpush1.xpose.msra.mxu0 0.0
        %878 = vmatprep.mubr.f32.mxu0 0.0
        %879 = vmatmul.mubr.f32.gmra.mrb[0].mxu0 %v806
        %v880 = vpop.f32.mrb[0].mxu0
        %v881 = vadd.f32 0.0, %v880
        %v882 = vpop.f32.mrb[0].mxu0
        %883 = vmatprep.mubr.f32.mxu0 0.0
        %884 = vmatmul.mubr.f32.gmra.mrb[0].mxu0 %v808
        %v885 = vpop.f32.mrb[0].mxu0
        %v886 = vadd.f32 0.0, %v885
        %v887 = vpop.f32.mrb[0].mxu0
        %888 = vdwg.mxu0
        %891 = vrot.lane.b32.xlu0 %v415, 124
        %v892 = vpop.permute.xlu0 %891
        %893 = vrot.lane.b32.xlu0 %v420, 124
        %v894 = vpop.permute.xlu0 %893
        %v895 = vsel %vm449, %v415, 0
        %v897 = vsel %vm449, %v420, 0
        %v899 = vsel %vm449, %v892, 0
        %v901 = vsel %vm449, %v894, 0
        %903 = vmatprep.subr.mxu0 0.0
        %904 = vmatpush1.xpose.msra.mxu0 %v899
        %905 = vmatprep.subr.mxu0 0.0
        %906 = vmatpush1.xpose.msra.mxu0 %v901
        %907 = vmatprep.subr.mxu0 0.0
        %908 = vmatpush1.xpose.msra.mxu0 0.0
        %909 = vmatprep.subr.mxu0 0.0
        %910 = vmatpush1.xpose.msra.mxu0 0.0
        %911 = vmatprep.subr.mxu0 0.0
        %912 = vmatpush1.xpose.msra.mxu0 0.0
        %913 = vmatprep.subr.mxu0 0.0
        %914 = vmatpush1.xpose.msra.mxu0 0.0
        %915 = vmatprep.subr.mxu0 0.0
        %916 = vmatpush1.xpose.msra.mxu0 0.0
        %917 = vmatprep.subr.mxu0 0.0
        %918 = vmatpush1.xpose.msra.mxu0 0.0
        %919 = vmatprep.subr.mxu0 0.0
        %920 = vmatpush1.xpose.msra.mxu0 0.0
        %921 = vmatprep.subr.mxu0 0.0
        %922 = vmatpush1.xpose.msra.mxu0 0.0
        %923 = vmatprep.subr.mxu0 0.0
        %924 = vmatpush1.xpose.msra.mxu0 0.0
        %925 = vmatprep.subr.mxu0 0.0
        %926 = vmatpush1.xpose.msra.mxu0 0.0
        %927 = vmatprep.subr.mxu0 0.0
        %928 = vmatpush1.xpose.msra.mxu0 0.0
        %929 = vmatprep.subr.mxu0 0.0
        %930 = vmatpush1.xpose.msra.mxu0 0.0
        %931 = vmatprep.subr.mxu0 0.0
        %932 = vmatpush1.xpose.msra.mxu0 0.0
        %933 = vmatprep.subr.mxu0 0.0
        %934 = vmatpush1.xpose.msra.mxu0 0.0
        %935 = vmatprep.subr.mxu0 0.0
        %936 = vmatpush1.xpose.msra.mxu0 0.0
        %937 = vmatprep.subr.mxu0 0.0
        %938 = vmatpush1.xpose.msra.mxu0 0.0
        %939 = vmatprep.subr.mxu0 0.0
        %940 = vmatpush1.xpose.msra.mxu0 0.0
        %941 = vmatprep.subr.mxu0 0.0
        %942 = vmatpush1.xpose.msra.mxu0 0.0
        %943 = vmatprep.subr.mxu0 0.0
        %944 = vmatpush1.xpose.msra.mxu0 0.0
        %945 = vmatprep.subr.mxu0 0.0
        %946 = vmatpush1.xpose.msra.mxu0 0.0
        %947 = vmatprep.subr.mxu0 0.0
        %948 = vmatpush1.xpose.msra.mxu0 0.0
        %949 = vmatprep.subr.mxu0 0.0
        %950 = vmatpush1.xpose.msra.mxu0 0.0
        %951 = vmatprep.subr.mxu0 0.0
        %952 = vmatpush1.xpose.msra.mxu0 0.0
        %953 = vmatprep.subr.mxu0 0.0
        %954 = vmatpush1.xpose.msra.mxu0 0.0
        %955 = vmatprep.subr.mxu0 0.0
        %956 = vmatpush1.xpose.msra.mxu0 0.0
        %957 = vmatprep.subr.mxu0 0.0
        %958 = vmatpush1.xpose.msra.mxu0 0.0
        %959 = vmatprep.subr.mxu0 0.0
        %960 = vmatpush1.xpose.msra.mxu0 0.0
        %961 = vmatprep.subr.mxu0 0.0
        %962 = vmatpush1.xpose.msra.mxu0 0.0
        %963 = vmatprep.subr.mxu0 0.0
        %964 = vmatpush1.xpose.msra.mxu0 0.0
        %965 = vmatprep.subr.mxu0 0.0
        %966 = vmatpush1.xpose.msra.mxu0 0.0
        %967 = vmatprep.mubr.f32.mxu0 0.0
        %968 = vmatmul.mubr.f32.gmra.mrb[0].mxu0 %v895
        %v969 = vpop.f32.mrb[0].mxu0
        %v970 = vadd.f32 0.0, %v969
        %v971 = vpop.f32.mrb[0].mxu0
        %972 = vmatprep.mubr.f32.mxu0 0.0
        %973 = vmatmul.mubr.f32.gmra.mrb[0].mxu0 %v897
        %v974 = vpop.f32.mrb[0].mxu0
        %v975 = vadd.f32 0.0, %v974
        %v976 = vpop.f32.mrb[0].mxu0
        %977 = vdwg.mxu0
        %980 = vrot.lane.b32.xlu0 %v425, 124
        %v981 = vpop.permute.xlu0 %980
        %982 = vrot.lane.b32.xlu0 %v430, 124
        %v983 = vpop.permute.xlu0 %982
        %v984 = vsel %vm449, %v425, 0
        %v986 = vsel %vm449, %v430, 0
        %v988 = vsel %vm449, %v981, 0
        %v990 = vsel %vm449, %v983, 0
        %992 = vmatprep.subr.mxu0 0.0
        %993 = vmatpush1.xpose.msra.mxu0 %v988
        %994 = vmatprep.subr.mxu0 0.0
        %995 = vmatpush1.xpose.msra.mxu0 %v990
        %996 = vmatprep.subr.mxu0 0.0
        %997 = vmatpush1.xpose.msra.mxu0 0.0
        %998 = vmatprep.subr.mxu0 0.0
        %999 = vmatpush1.xpose.msra.mxu0 0.0
        %1000 = vmatprep.subr.mxu0 0.0
        %1001 = vmatpush1.xpose.msra.mxu0 0.0
        %1002 = vmatprep.subr.mxu0 0.0
        %1003 = vmatpush1.xpose.msra.mxu0 0.0
        %1004 = vmatprep.subr.mxu0 0.0
        %1005 = vmatpush1.xpose.msra.mxu0 0.0
        %1006 = vmatprep.subr.mxu0 0.0
        %1007 = vmatpush1.xpose.msra.mxu0 0.0
        %1008 = vmatprep.subr.mxu0 0.0
        %1009 = vmatpush1.xpose.msra.mxu0 0.0
        %1010 = vmatprep.subr.mxu0 0.0
        %1011 = vmatpush1.xpose.msra.mxu0 0.0
        %1012 = vmatprep.subr.mxu0 0.0
        %1013 = vmatpush1.xpose.msra.mxu0 0.0
        %1014 = vmatprep.subr.mxu0 0.0
        %1015 = vmatpush1.xpose.msra.mxu0 0.0
        %1016 = vmatprep.subr.mxu0 0.0
        %1017 = vmatpush1.xpose.msra.mxu0 0.0
        %1018 = vmatprep.subr.mxu0 0.0
        %1019 = vmatpush1.xpose.msra.mxu0 0.0
        %1020 = vmatprep.subr.mxu0 0.0
        %1021 = vmatpush1.xpose.msra.mxu0 0.0
        %1022 = vmatprep.subr.mxu0 0.0
        %1023 = vmatpush1.xpose.msra.mxu0 0.0
        %1024 = vmatprep.subr.mxu0 0.0
        %1025 = vmatpush1.xpose.msra.mxu0 0.0
        %1026 = vmatprep.subr.mxu0 0.0
        %1027 = vmatpush1.xpose.msra.mxu0 0.0
        %1028 = vmatprep.subr.mxu0 0.0
        %1029 = vmatpush1.xpose.msra.mxu0 0.0
        %1030 = vmatprep.subr.mxu0 0.0
        %1031 = vmatpush1.xpose.msra.mxu0 0.0
        %1032 = vmatprep.subr.mxu0 0.0
        %1033 = vmatpush1.xpose.msra.mxu0 0.0
        %1034 = vmatprep.subr.mxu0 0.0
        %1035 = vmatpush1.xpose.msra.mxu0 0.0
        %1036 = vmatprep.subr.mxu0 0.0
        %1037 = vmatpush1.xpose.msra.mxu0 0.0
        %1038 = vmatprep.subr.mxu0 0.0
        %1039 = vmatpush1.xpose.msra.mxu0 0.0
        %1040 = vmatprep.subr.mxu0 0.0
        %1041 = vmatpush1.xpose.msra.mxu0 0.0
        %1042 = vmatprep.subr.mxu0 0.0
        %1043 = vmatpush1.xpose.msra.mxu0 0.0
        %1044 = vmatprep.subr.mxu0 0.0
        %1045 = vmatpush1.xpose.msra.mxu0 0.0
        %1046 = vmatprep.subr.mxu0 0.0
        %1047 = vmatpush1.xpose.msra.mxu0 0.0
        %1048 = vmatprep.subr.mxu0 0.0
        %1049 = vmatpush1.xpose.msra.mxu0 0.0
        %1050 = vmatprep.subr.mxu0 0.0
        %1051 = vmatpush1.xpose.msra.mxu0 0.0
        %1052 = vmatprep.subr.mxu0 0.0
        %1053 = vmatpush1.xpose.msra.mxu0 0.0
        %1054 = vmatprep.subr.mxu0 0.0
        %1055 = vmatpush1.xpose.msra.mxu0 0.0
        %1056 = vmatprep.mubr.f32.mxu0 0.0
        %1057 = vmatmul.mubr.f32.gmra.mrb[0].mxu0 %v984
        %v1058 = vpop.f32.mrb[0].mxu0
        %v1059 = vadd.f32 0.0, %v1058
        %v1060 = vpop.f32.mrb[0].mxu0
        %1061 = vmatprep.mubr.f32.mxu0 0.0
        %1062 = vmatmul.mubr.f32.gmra.mrb[0].mxu0 %v986
        %v1063 = vpop.f32.mrb[0].mxu0
        %v1064 = vadd.f32 0.0, %v1063
        %v1065 = vpop.f32.mrb[0].mxu0
        %1066 = vdwg.mxu0
        %1069 = vrot.lane.b32.xlu0 %v435, 124
        %v1070 = vpop.permute.xlu0 %1069
        %1071 = vrot.lane.b32.xlu0 %v440, 124
        %v1072 = vpop.permute.xlu0 %1071
        %v1073 = vsel %vm449, %v435, 0
        %v1075 = vsel %vm449, %v440, 0
        %v1077 = vsel %vm449, %v1070, 0
        %v1079 = vsel %vm449, %v1072, 0
        %1081 = vmatprep.subr.mxu0 0.0
        %1082 = vmatpush1.xpose.msra.mxu0 %v1077
        %1083 = vmatprep.subr.mxu0 0.0
        %1084 = vmatpush1.xpose.msra.mxu0 %v1079
        %1085 = vmatprep.subr.mxu0 0.0
        %1086 = vmatpush1.xpose.msra.mxu0 0.0
        %1087 = vmatprep.subr.mxu0 0.0
        %1088 = vmatpush1.xpose.msra.mxu0 0.0
        %1089 = vmatprep.subr.mxu0 0.0
        %1090 = vmatpush1.xpose.msra.mxu0 0.0
        %1091 = vmatprep.subr.mxu0 0.0
        %1092 = vmatpush1.xpose.msra.mxu0 0.0
        %1093 = vmatprep.subr.mxu0 0.0
        %1094 = vmatpush1.xpose.msra.mxu0 0.0
        %1095 = vmatprep.subr.mxu0 0.0
        %1096 = vmatpush1.xpose.msra.mxu0 0.0
        %1097 = vmatprep.subr.mxu0 0.0
        %1098 = vmatpush1.xpose.msra.mxu0 0.0
        %1099 = vmatprep.subr.mxu0 0.0
        %1100 = vmatpush1.xpose.msra.mxu0 0.0
        %1101 = vmatprep.subr.mxu0 0.0
        %1102 = vmatpush1.xpose.msra.mxu0 0.0
        %1103 = vmatprep.subr.mxu0 0.0
        %1104 = vmatpush1.xpose.msra.mxu0 0.0
        %1105 = vmatprep.subr.mxu0 0.0
        %1106 = vmatpush1.xpose.msra.mxu0 0.0
        %1107 = vmatprep.subr.mxu0 0.0
        %1108 = vmatpush1.xpose.msra.mxu0 0.0
        %1109 = vmatprep.subr.mxu0 0.0
        %1110 = vmatpush1.xpose.msra.mxu0 0.0
        %1111 = vmatprep.subr.mxu0 0.0
        %1112 = vmatpush1.xpose.msra.mxu0 0.0
        %1113 = vmatprep.subr.mxu0 0.0
        %1114 = vmatpush1.xpose.msra.mxu0 0.0
        %1115 = vmatprep.subr.mxu0 0.0
        %1116 = vmatpush1.xpose.msra.mxu0 0.0
        %1117 = vmatprep.subr.mxu0 0.0
        %1118 = vmatpush1.xpose.msra.mxu0 0.0
        %1119 = vmatprep.subr.mxu0 0.0
        %1120 = vmatpush1.xpose.msra.mxu0 0.0
        %1121 = vmatprep.subr.mxu0 0.0
        %1122 = vmatpush1.xpose.msra.mxu0 0.0
        %1123 = vmatprep.subr.mxu0 0.0
        %1124 = vmatpush1.xpose.msra.mxu0 0.0
        %1125 = vmatprep.subr.mxu0 0.0
        %1126 = vmatpush1.xpose.msra.mxu0 0.0
        %1127 = vmatprep.subr.mxu0 0.0
        %1128 = vmatpush1.xpose.msra.mxu0 0.0
        %1129 = vmatprep.subr.mxu0 0.0
        %1130 = vmatpush1.xpose.msra.mxu0 0.0
        %1131 = vmatprep.subr.mxu0 0.0
        %1132 = vmatpush1.xpose.msra.mxu0 0.0
        %1133 = vmatprep.subr.mxu0 0.0
        %1134 = vmatpush1.xpose.msra.mxu0 0.0
        %1135 = vmatprep.subr.mxu0 0.0
        %1136 = vmatpush1.xpose.msra.mxu0 0.0
        %1137 = vmatprep.subr.mxu0 0.0
        %1138 = vmatpush1.xpose.msra.mxu0 0.0
        %1139 = vmatprep.subr.mxu0 0.0
        %1140 = vmatpush1.xpose.msra.mxu0 0.0
        %1141 = vmatprep.subr.mxu0 0.0
        %1142 = vmatpush1.xpose.msra.mxu0 0.0
        %1143 = vmatprep.subr.mxu0 0.0
        %1144 = vmatpush1.xpose.msra.mxu0 0.0
        %1145 = vmatprep.mubr.f32.mxu0 0.0
        %1146 = vmatmul.mubr.f32.gmra.mrb[0].mxu0 %v1073
        %v1147 = vpop.f32.mrb[0].mxu0
        %v1148 = vadd.f32 0.0, %v1147
        %v1149 = vpop.f32.mrb[0].mxu0
        %1150 = vmatprep.mubr.f32.mxu0 0.0
        %1151 = vmatmul.mubr.f32.gmra.mrb[0].mxu0 %v1075
        %v1152 = vpop.f32.mrb[0].mxu0
        %v1153 = vadd.f32 0.0, %v1152
        %v1154 = vpop.f32.mrb[0].mxu0
        %1155 = vdwg.mxu0
        %vm1156 = vcmask 130048
        %v1157 = vsel %vm1156, %v525, -inf
        %1158 = vmax.xlane.f32.xlu0 %v1157
        %v1159 = vpop.xlane.xlu0 %1158
        %v1160 = vsel %vm1156, %v530, -inf
        %1161 = vmax.xlane.f32.xlu0 %v1160
        %v1162 = vpop.xlane.xlu0 %1161
        %v1163 = vsel %vm1156, %v614, -inf
        %1164 = vmax.xlane.f32.xlu0 %v1163
        %v1165 = vpop.xlane.xlu0 %1164
        %v1166 = vsel %vm1156, %v619, -inf
        %1167 = vmax.xlane.f32.xlu0 %v1166
        %v1168 = vpop.xlane.xlu0 %1167
        %v1169 = vsel %vm1156, %v703, -inf
        %1170 = vmax.xlane.f32.xlu0 %v1169
        %v1171 = vpop.xlane.xlu0 %1170
        %v1172 = vsel %vm1156, %v708, -inf
        %1173 = vmax.xlane.f32.xlu0 %v1172
        %v1174 = vpop.xlane.xlu0 %1173
        %v1175 = vsel %vm1156, %v792, -inf
        %1176 = vmax.xlane.f32.xlu0 %v1175
        %v1177 = vpop.xlane.xlu0 %1176
        %v1178 = vsel %vm1156, %v797, -inf
        %1179 = vmax.xlane.f32.xlu0 %v1178
        %v1180 = vpop.xlane.xlu0 %1179
        %v1181 = vsel %vm1156, %v881, -inf
        %1182 = vmax.xlane.f32.xlu0 %v1181
        %v1183 = vpop.xlane.xlu0 %1182
        %v1184 = vsel %vm1156, %v886, -inf
        %1185 = vmax.xlane.f32.xlu0 %v1184
        %v1186 = vpop.xlane.xlu0 %1185
        %v1187 = vsel %vm1156, %v970, -inf
        %1188 = vmax.xlane.f32.xlu0 %v1187
        %v1189 = vpop.xlane.xlu0 %1188
        %v1190 = vsel %vm1156, %v975, -inf
        %1191 = vmax.xlane.f32.xlu0 %v1190
        %v1192 = vpop.xlane.xlu0 %1191
        %v1193 = vsel %vm1156, %v1059, -inf
        %1194 = vmax.xlane.f32.xlu0 %v1193
        %v1195 = vpop.xlane.xlu0 %1194
        %v1196 = vsel %vm1156, %v1064, -inf
        %1197 = vmax.xlane.f32.xlu0 %v1196
        %v1198 = vpop.xlane.xlu0 %1197
        %v1199 = vsel %vm1156, %v1148, -inf
        %1200 = vmax.xlane.f32.xlu0 %v1199
        %v1201 = vpop.xlane.xlu0 %1200
        %v1202 = vsel %vm1156, %v1153, -inf
        %1203 = vmax.xlane.f32.xlu0 %v1202
        %v1204 = vpop.xlane.xlu0 %1203
        %v1205 = vsub.f32 %v525, %v1159
        %v1206 = vsub.f32 %v530, %v1162
        %v1207 = vsub.f32 %v614, %v1165
        %v1208 = vsub.f32 %v619, %v1168
        %v1209 = vsub.f32 %v703, %v1171
        %v1210 = vsub.f32 %v708, %v1174
        %v1211 = vsub.f32 %v792, %v1177
        %v1212 = vsub.f32 %v797, %v1180
        %v1213 = vsub.f32 %v881, %v1183
        %v1214 = vsub.f32 %v886, %v1186
        %v1215 = vsub.f32 %v970, %v1189
        %v1216 = vsub.f32 %v975, %v1192
        %v1217 = vsub.f32 %v1059, %v1195
        %v1218 = vsub.f32 %v1064, %v1198
        %v1219 = vsub.f32 %v1148, %v1201
        %v1220 = vsub.f32 %v1153, %v1204
        %v1221 = vmul.f32 %v1205, 1.442695
        %v1222 = vpow.pop %v1221
        %v1223 = vmul.f32 %v1206, 1.442695
        %v1224 = vpow.pop %v1223
        %v1225 = vmul.f32 %v1207, 1.442695
        %v1226 = vpow.pop %v1225
        %v1227 = vmul.f32 %v1208, 1.442695
        %v1228 = vpow.pop %v1227
        %v1229 = vmul.f32 %v1209, 1.442695
        %v1230 = vpow.pop %v1229
        %v1231 = vmul.f32 %v1210, 1.442695
        %v1232 = vpow.pop %v1231
        %v1233 = vmul.f32 %v1211, 1.442695
        %v1234 = vpow.pop %v1233
        %v1235 = vmul.f32 %v1212, 1.442695
        %v1236 = vpow.pop %v1235
        %v1237 = vmul.f32 %v1213, 1.442695
        %v1238 = vpow.pop %v1237
        %v1239 = vmul.f32 %v1214, 1.442695
        %v1240 = vpow.pop %v1239
        %v1241 = vmul.f32 %v1215, 1.442695
        %v1242 = vpow.pop %v1241
        %v1243 = vmul.f32 %v1216, 1.442695
        %v1244 = vpow.pop %v1243
        %v1245 = vmul.f32 %v1217, 1.442695
        %v1246 = vpow.pop %v1245
        %v1247 = vmul.f32 %v1218, 1.442695
        %v1248 = vpow.pop %v1247
        %v1249 = vmul.f32 %v1219, 1.442695
        %v1250 = vpow.pop %v1249
        %v1251 = vmul.f32 %v1220, 1.442695
        %v1252 = vpow.pop %v1251
        %v1253 = vsel %vm1156, %v1222, 0.0
        %1254 = vadd.xlane.f32.xlu0 %v1253
        %v1255 = vpop.xlane.xlu0 %1254
        %v1256 = vsel %vm1156, %v1224, 0.0
        %1257 = vadd.xlane.f32.xlu0 %v1256
        %v1258 = vpop.xlane.xlu0 %1257
        %v1259 = vsel %vm1156, %v1226, 0.0
        %1260 = vadd.xlane.f32.xlu0 %v1259
        %v1261 = vpop.xlane.xlu0 %1260
        %v1262 = vsel %vm1156, %v1228, 0.0
        %1263 = vadd.xlane.f32.xlu0 %v1262
        %v1264 = vpop.xlane.xlu0 %1263
        %v1265 = vsel %vm1156, %v1230, 0.0
        %1266 = vadd.xlane.f32.xlu0 %v1265
        %v1267 = vpop.xlane.xlu0 %1266
        %v1268 = vsel %vm1156, %v1232, 0.0
        %1269 = vadd.xlane.f32.xlu0 %v1268
        %v1270 = vpop.xlane.xlu0 %1269
        %v1271 = vsel %vm1156, %v1234, 0.0
        %1272 = vadd.xlane.f32.xlu0 %v1271
        %v1273 = vpop.xlane.xlu0 %1272
        %v1274 = vsel %vm1156, %v1236, 0.0
        %1275 = vadd.xlane.f32.xlu0 %v1274
        %v1276 = vpop.xlane.xlu0 %1275
        %v1277 = vsel %vm1156, %v1238, 0.0
        %1278 = vadd.xlane.f32.xlu0 %v1277
        %v1279 = vpop.xlane.xlu0 %1278
        %v1280 = vsel %vm1156, %v1240, 0.0
        %1281 = vadd.xlane.f32.xlu0 %v1280
        %v1282 = vpop.xlane.xlu0 %1281
        %v1283 = vsel %vm1156, %v1242, 0.0
        %1284 = vadd.xlane.f32.xlu0 %v1283
        %v1285 = vpop.xlane.xlu0 %1284
        %v1286 = vsel %vm1156, %v1244, 0.0
        %1287 = vadd.xlane.f32.xlu0 %v1286
        %v1288 = vpop.xlane.xlu0 %1287
        %v1289 = vsel %vm1156, %v1246, 0.0
        %1290 = vadd.xlane.f32.xlu0 %v1289
        %v1291 = vpop.xlane.xlu0 %1290
        %v1292 = vsel %vm1156, %v1248, 0.0
        %1293 = vadd.xlane.f32.xlu0 %v1292
        %v1294 = vpop.xlane.xlu0 %1293
        %v1295 = vsel %vm1156, %v1250, 0.0
        %1296 = vadd.xlane.f32.xlu0 %v1295
        %v1297 = vpop.xlane.xlu0 %1296
        %v1298 = vsel %vm1156, %v1252, 0.0
        %1299 = vadd.xlane.f32.xlu0 %v1298
        %v1300 = vpop.xlane.xlu0 %1299
        %v1301 = vrcp.pop %v1255
        %v1302 = vrcp.pop %v1258
        %v1303 = vrcp.pop %v1261
        %v1304 = vrcp.pop %v1264
        %v1305 = vrcp.pop %v1267
        %v1306 = vrcp.pop %v1270
        %v1307 = vrcp.pop %v1273
        %v1308 = vrcp.pop %v1276
        %v1309 = vrcp.pop %v1279
        %v1310 = vrcp.pop %v1282
        %v1311 = vrcp.pop %v1285
        %v1312 = vrcp.pop %v1288
        %v1313 = vrcp.pop %v1291
        %v1314 = vrcp.pop %v1294
        %v1315 = vrcp.pop %v1297
        %v1316 = vrcp.pop %v1300
        %v1317 = vmul.f32 %v1222, %v1301
        %v1318 = vmul.f32 %v1224, %v1302
        %v1319 = vmul.f32 %v1226, %v1303
        %v1320 = vmul.f32 %v1228, %v1304
        %v1321 = vmul.f32 %v1230, %v1305
        %v1322 = vmul.f32 %v1232, %v1306
        %v1323 = vmul.f32 %v1234, %v1307
        %v1324 = vmul.f32 %v1236, %v1308
        %v1325 = vmul.f32 %v1238, %v1309
        %v1326 = vmul.f32 %v1240, %v1310
        %v1327 = vmul.f32 %v1242, %v1311
        %v1328 = vmul.f32 %v1244, %v1312
        %v1329 = vmul.f32 %v1246, %v1313
        %v1330 = vmul.f32 %v1248, %v1314
        %v1331 = vmul.f32 %v1250, %v1315
        %v1332 = vmul.f32 %v1252, %v1316
        %1333 = vrot.lane.b32.xlu0 %v365, 120
        %v1334 = vpop.permute.xlu0 %1333
        %1335 = vrot.lane.b32.xlu0 %v370, 120
        %v1336 = vpop.permute.xlu0 %1335
        %v1340 = vsel %vm1156, %v1317, 0
        %v1343 = vsel %vm1156, %v1318, 0
        %1345 = vmatprep.subr.mxu0 0.0
        %1346 = vmatpush1.msra.mxu0 %v1334
        %1347 = vmatprep.subr.mxu0 0.0
        %1348 = vmatpush1.msra.mxu0 %v1336
        %1349 = vmatprep.subr.mxu0 0.0
        %1350 = vmatpush1.msra.mxu0 0.0
        %1351 = vmatprep.subr.mxu0 0.0
        %1352 = vmatpush1.msra.mxu0 0.0
        %1353 = vmatprep.subr.mxu0 0.0
        %1354 = vmatpush1.msra.mxu0 0.0
        %1355 = vmatprep.subr.mxu0 0.0
        %1356 = vmatpush1.msra.mxu0 0.0
        %1357 = vmatprep.subr.mxu0 0.0
        %1358 = vmatpush1.msra.mxu0 0.0
        %1359 = vmatprep.subr.mxu0 0.0
        %1360 = vmatpush1.msra.mxu0 0.0
        %1361 = vmatprep.subr.mxu0 0.0
        %1362 = vmatpush1.msra.mxu0 0.0
        %1363 = vmatprep.subr.mxu0 0.0
        %1364 = vmatpush1.msra.mxu0 0.0
        %1365 = vmatprep.subr.mxu0 0.0
        %1366 = vmatpush1.msra.mxu0 0.0
        %1367 = vmatprep.subr.mxu0 0.0
        %1368 = vmatpush1.msra.mxu0 0.0
        %1369 = vmatprep.subr.mxu0 0.0
        %1370 = vmatpush1.msra.mxu0 0.0
        %1371 = vmatprep.subr.mxu0 0.0
        %1372 = vmatpush1.msra.mxu0 0.0
        %1373 = vmatprep.subr.mxu0 0.0
        %1374 = vmatpush1.msra.mxu0 0.0
        %1375 = vmatprep.subr.mxu0 0.0
        %1376 = vmatpush1.msra.mxu0 0.0
        %1377 = vmatprep.subr.mxu0 0.0
        %1378 = vmatpush1.msra.mxu0 0.0
        %1379 = vmatprep.subr.mxu0 0.0
        %1380 = vmatpush1.msra.mxu0 0.0
        %1381 = vmatprep.subr.mxu0 0.0
        %1382 = vmatpush1.msra.mxu0 0.0
        %1383 = vmatprep.subr.mxu0 0.0
        %1384 = vmatpush1.msra.mxu0 0.0
        %1385 = vmatprep.subr.mxu0 0.0
        %1386 = vmatpush1.msra.mxu0 0.0
        %1387 = vmatprep.subr.mxu0 0.0
        %1388 = vmatpush1.msra.mxu0 0.0
        %1389 = vmatprep.subr.mxu0 0.0
        %1390 = vmatpush1.msra.mxu0 0.0
        %1391 = vmatprep.subr.mxu0 0.0
        %1392 = vmatpush1.msra.mxu0 0.0
        %1393 = vmatprep.subr.mxu0 0.0
        %1394 = vmatpush1.msra.mxu0 0.0
        %1395 = vmatprep.subr.mxu0 0.0
        %1396 = vmatpush1.msra.mxu0 0.0
        %1397 = vmatprep.subr.mxu0 0.0
        %1398 = vmatpush1.msra.mxu0 0.0
        %1399 = vmatprep.subr.mxu0 0.0
        %1400 = vmatpush1.msra.mxu0 0.0
        %1401 = vmatprep.subr.mxu0 0.0
        %1402 = vmatpush1.msra.mxu0 0.0
        %1403 = vmatprep.subr.mxu0 0.0
        %1404 = vmatpush1.msra.mxu0 0.0
        %1405 = vmatprep.subr.mxu0 0.0
        %1406 = vmatpush1.msra.mxu0 0.0
        %1407 = vmatprep.subr.mxu0 0.0
        %1408 = vmatpush1.msra.mxu0 0.0
        %1409 = vmatprep.mubr.f32.mxu0 0.0
        %1410 = vmatmul.mubr.f32.gmra.mrb[0].mxu0 %v1340
        %v1411 = vpop.f32.mrb[0].mxu0
        %v1412 = vadd.f32 0.0, %v1411
        %v1413 = vpop.f32.mrb[0].mxu0
        %1414 = vmatprep.mubr.f32.mxu0 0.0
        %1415 = vmatmul.mubr.f32.gmra.mrb[0].mxu0 %v1343
        %v1416 = vpop.f32.mrb[0].mxu0
        %v1417 = vadd.f32 0.0, %v1416
        %v1418 = vpop.f32.mrb[0].mxu0
        %1419 = vdwg.mxu0
        %1420 = vrot.lane.b32.xlu0 %v375, 120
        %v1421 = vpop.permute.xlu0 %1420
        %1422 = vrot.lane.b32.xlu0 %v380, 120
        %v1423 = vpop.permute.xlu0 %1422
        %v1427 = vsel %vm1156, %v1319, 0
        %v1430 = vsel %vm1156, %v1320, 0
        %1432 = vmatprep.subr.mxu0 0.0
        %1433 = vmatpush1.msra.mxu0 %v1421
        %1434 = vmatprep.subr.mxu0 0.0
        %1435 = vmatpush1.msra.mxu0 %v1423
        %1436 = vmatprep.subr.mxu0 0.0
        %1437 = vmatpush1.msra.mxu0 0.0
        %1438 = vmatprep.subr.mxu0 0.0
        %1439 = vmatpush1.msra.mxu0 0.0
        %1440 = vmatprep.subr.mxu0 0.0
        %1441 = vmatpush1.msra.mxu0 0.0
        %1442 = vmatprep.subr.mxu0 0.0
        %1443 = vmatpush1.msra.mxu0 0.0
        %1444 = vmatprep.subr.mxu0 0.0
        %1445 = vmatpush1.msra.mxu0 0.0
        %1446 = vmatprep.subr.mxu0 0.0
        %1447 = vmatpush1.msra.mxu0 0.0
        %1448 = vmatprep.subr.mxu0 0.0
        %1449 = vmatpush1.msra.mxu0 0.0
        %1450 = vmatprep.subr.mxu0 0.0
        %1451 = vmatpush1.msra.mxu0 0.0
        %1452 = vmatprep.subr.mxu0 0.0
        %1453 = vmatpush1.msra.mxu0 0.0
        %1454 = vmatprep.subr.mxu0 0.0
        %1455 = vmatpush1.msra.mxu0 0.0
        %1456 = vmatprep.subr.mxu0 0.0
        %1457 = vmatpush1.msra.mxu0 0.0
        %1458 = vmatprep.subr.mxu0 0.0
        %1459 = vmatpush1.msra.mxu0 0.0
        %1460 = vmatprep.subr.mxu0 0.0
        %1461 = vmatpush1.msra.mxu0 0.0
        %1462 = vmatprep.subr.mxu0 0.0
        %1463 = vmatpush1.msra.mxu0 0.0
        %1464 = vmatprep.subr.mxu0 0.0
        %1465 = vmatpush1.msra.mxu0 0.0
        %1466 = vmatprep.subr.mxu0 0.0
        %1467 = vmatpush1.msra.mxu0 0.0
        %1468 = vmatprep.subr.mxu0 0.0
        %1469 = vmatpush1.msra.mxu0 0.0
        %1470 = vmatprep.subr.mxu0 0.0
        %1471 = vmatpush1.msra.mxu0 0.0
        %1472 = vmatprep.subr.mxu0 0.0
        %1473 = vmatpush1.msra.mxu0 0.0
        %1474 = vmatprep.subr.mxu0 0.0
        %1475 = vmatpush1.msra.mxu0 0.0
        %1476 = vmatprep.subr.mxu0 0.0
        %1477 = vmatpush1.msra.mxu0 0.0
        %1478 = vmatprep.subr.mxu0 0.0
        %1479 = vmatpush1.msra.mxu0 0.0
        %1480 = vmatprep.subr.mxu0 0.0
        %1481 = vmatpush1.msra.mxu0 0.0
        %1482 = vmatprep.subr.mxu0 0.0
        %1483 = vmatpush1.msra.mxu0 0.0
        %1484 = vmatprep.subr.mxu0 0.0
        %1485 = vmatpush1.msra.mxu0 0.0
        %1486 = vmatprep.subr.mxu0 0.0
        %1487 = vmatpush1.msra.mxu0 0.0
        %1488 = vmatprep.subr.mxu0 0.0
        %1489 = vmatpush1.msra.mxu0 0.0
        %1490 = vmatprep.subr.mxu0 0.0
        %1491 = vmatpush1.msra.mxu0 0.0
        %1492 = vmatprep.subr.mxu0 0.0
        %1493 = vmatpush1.msra.mxu0 0.0
        %1494 = vmatprep.subr.mxu0 0.0
        %1495 = vmatpush1.msra.mxu0 0.0
        %1496 = vmatprep.mubr.f32.mxu0 0.0
        %1497 = vmatmul.mubr.f32.gmra.mrb[0].mxu0 %v1427
        %v1498 = vpop.f32.mrb[0].mxu0
        %v1499 = vadd.f32 0.0, %v1498
        %v1500 = vpop.f32.mrb[0].mxu0
        %1501 = vmatprep.mubr.f32.mxu0 0.0
        %1502 = vmatmul.mubr.f32.gmra.mrb[0].mxu0 %v1430
        %v1503 = vpop.f32.mrb[0].mxu0
        %v1504 = vadd.f32 0.0, %v1503
        %v1505 = vpop.f32.mrb[0].mxu0
        %1506 = vdwg.mxu0
        %1507 = vrot.lane.b32.xlu0 %v385, 120
        %v1508 = vpop.permute.xlu0 %1507
        %1509 = vrot.lane.b32.xlu0 %v390, 120
        %v1510 = vpop.permute.xlu0 %1509
        %v1514 = vsel %vm1156, %v1321, 0
        %v1517 = vsel %vm1156, %v1322, 0
        %1519 = vmatprep.subr.mxu0 0.0
        %1520 = vmatpush1.msra.mxu0 %v1508
        %1521 = vmatprep.subr.mxu0 0.0
        %1522 = vmatpush1.msra.mxu0 %v1510
        %1523 = vmatprep.subr.mxu0 0.0
        %1524 = vmatpush1.msra.mxu0 0.0
        %1525 = vmatprep.subr.mxu0 0.0
        %1526 = vmatpush1.msra.mxu0 0.0
        %1527 = vmatprep.subr.mxu0 0.0
        %1528 = vmatpush1.msra.mxu0 0.0
        %1529 = vmatprep.subr.mxu0 0.0
        %1530 = vmatpush1.msra.mxu0 0.0
        %1531 = vmatprep.subr.mxu0 0.0
        %1532 = vmatpush1.msra.mxu0 0.0
        %1533 = vmatprep.subr.mxu0 0.0
        %1534 = vmatpush1.msra.mxu0 0.0
        %1535 = vmatprep.subr.mxu0 0.0
        %1536 = vmatpush1.msra.mxu0 0.0
        %1537 = vmatprep.subr.mxu0 0.0
        %1538 = vmatpush1.msra.mxu0 0.0
        %1539 = vmatprep.subr.mxu0 0.0
        %1540 = vmatpush1.msra.mxu0 0.0
        %1541 = vmatprep.subr.mxu0 0.0
        %1542 = vmatpush1.msra.mxu0 0.0
        %1543 = vmatprep.subr.mxu0 0.0
        %1544 = vmatpush1.msra.mxu0 0.0
        %1545 = vmatprep.subr.mxu0 0.0
        %1546 = vmatpush1.msra.mxu0 0.0
        %1547 = vmatprep.subr.mxu0 0.0
        %1548 = vmatpush1.msra.mxu0 0.0
        %1549 = vmatprep.subr.mxu0 0.0
        %1550 = vmatpush1.msra.mxu0 0.0
        %1551 = vmatprep.subr.mxu0 0.0
        %1552 = vmatpush1.msra.mxu0 0.0
        %1553 = vmatprep.subr.mxu0 0.0
        %1554 = vmatpush1.msra.mxu0 0.0
        %1555 = vmatprep.subr.mxu0 0.0
        %1556 = vmatpush1.msra.mxu0 0.0
        %1557 = vmatprep.subr.mxu0 0.0
        %1558 = vmatpush1.msra.mxu0 0.0
        %1559 = vmatprep.subr.mxu0 0.0
        %1560 = vmatpush1.msra.mxu0 0.0
        %1561 = vmatprep.subr.mxu0 0.0
        %1562 = vmatpush1.msra.mxu0 0.0
        %1563 = vmatprep.subr.mxu0 0.0
        %1564 = vmatpush1.msra.mxu0 0.0
        %1565 = vmatprep.subr.mxu0 0.0
        %1566 = vmatpush1.msra.mxu0 0.0
        %1567 = vmatprep.subr.mxu0 0.0
        %1568 = vmatpush1.msra.mxu0 0.0
        %1569 = vmatprep.subr.mxu0 0.0
        %1570 = vmatpush1.msra.mxu0 0.0
        %1571 = vmatprep.subr.mxu0 0.0
        %1572 = vmatpush1.msra.mxu0 0.0
        %1573 = vmatprep.subr.mxu0 0.0
        %1574 = vmatpush1.msra.mxu0 0.0
        %1575 = vmatprep.subr.mxu0 0.0
        %1576 = vmatpush1.msra.mxu0 0.0
        %1577 = vmatprep.subr.mxu0 0.0
        %1578 = vmatpush1.msra.mxu0 0.0
        %1579 = vmatprep.subr.mxu0 0.0
        %1580 = vmatpush1.msra.mxu0 0.0
        %1581 = vmatprep.subr.mxu0 0.0
        %1582 = vmatpush1.msra.mxu0 0.0
        %1583 = vmatprep.mubr.f32.mxu0 0.0
        %1584 = vmatmul.mubr.f32.gmra.mrb[0].mxu0 %v1514
        %v1585 = vpop.f32.mrb[0].mxu0
        %v1586 = vadd.f32 0.0, %v1585
        %v1587 = vpop.f32.mrb[0].mxu0
        %1588 = vmatprep.mubr.f32.mxu0 0.0
        %1589 = vmatmul.mubr.f32.gmra.mrb[0].mxu0 %v1517
        %v1590 = vpop.f32.mrb[0].mxu0
        %v1591 = vadd.f32 0.0, %v1590
        %v1592 = vpop.f32.mrb[0].mxu0
        %1593 = vdwg.mxu0
        %1594 = vrot.lane.b32.xlu0 %v395, 120
        %v1595 = vpop.permute.xlu0 %1594
        %1596 = vrot.lane.b32.xlu0 %v400, 120
        %v1597 = vpop.permute.xlu0 %1596
        %v1601 = vsel %vm1156, %v1323, 0
        %v1604 = vsel %vm1156, %v1324, 0
        %1606 = vmatprep.subr.mxu0 0.0
        %1607 = vmatpush1.msra.mxu0 %v1595
        %1608 = vmatprep.subr.mxu0 0.0
        %1609 = vmatpush1.msra.mxu0 %v1597
        %1610 = vmatprep.subr.mxu0 0.0
        %1611 = vmatpush1.msra.mxu0 0.0
        %1612 = vmatprep.subr.mxu0 0.0
        %1613 = vmatpush1.msra.mxu0 0.0
        %1614 = vmatprep.subr.mxu0 0.0
        %1615 = vmatpush1.msra.mxu0 0.0
        %1616 = vmatprep.subr.mxu0 0.0
        %1617 = vmatpush1.msra.mxu0 0.0
        %1618 = vmatprep.subr.mxu0 0.0
        %1619 = vmatpush1.msra.mxu0 0.0
        %1620 = vmatprep.subr.mxu0 0.0
        %1621 = vmatpush1.msra.mxu0 0.0
        %1622 = vmatprep.subr.mxu0 0.0
        %1623 = vmatpush1.msra.mxu0 0.0
        %1624 = vmatprep.subr.mxu0 0.0
        %1625 = vmatpush1.msra.mxu0 0.0
        %1626 = vmatprep.subr.mxu0 0.0
        %1627 = vmatpush1.msra.mxu0 0.0
        %1628 = vmatprep.subr.mxu0 0.0
        %1629 = vmatpush1.msra.mxu0 0.0
        %1630 = vmatprep.subr.mxu0 0.0
        %1631 = vmatpush1.msra.mxu0 0.0
        %1632 = vmatprep.subr.mxu0 0.0
        %1633 = vmatpush1.msra.mxu0 0.0
        %1634 = vmatprep.subr.mxu0 0.0
        %1635 = vmatpush1.msra.mxu0 0.0
        %1636 = vmatprep.subr.mxu0 0.0
        %1637 = vmatpush1.msra.mxu0 0.0
        %1638 = vmatprep.subr.mxu0 0.0
        %1639 = vmatpush1.msra.mxu0 0.0
        %1640 = vmatprep.subr.mxu0 0.0
        %1641 = vmatpush1.msra.mxu0 0.0
        %1642 = vmatprep.subr.mxu0 0.0
        %1643 = vmatpush1.msra.mxu0 0.0
        %1644 = vmatprep.subr.mxu0 0.0
        %1645 = vmatpush1.msra.mxu0 0.0
        %1646 = vmatprep.subr.mxu0 0.0
        %1647 = vmatpush1.msra.mxu0 0.0
        %1648 = vmatprep.subr.mxu0 0.0
        %1649 = vmatpush1.msra.mxu0 0.0
        %1650 = vmatprep.subr.mxu0 0.0
        %1651 = vmatpush1.msra.mxu0 0.0
        %1652 = vmatprep.subr.mxu0 0.0
        %1653 = vmatpush1.msra.mxu0 0.0
        %1654 = vmatprep.subr.mxu0 0.0
        %1655 = vmatpush1.msra.mxu0 0.0
        %1656 = vmatprep.subr.mxu0 0.0
        %1657 = vmatpush1.msra.mxu0 0.0
        %1658 = vmatprep.subr.mxu0 0.0
        %1659 = vmatpush1.msra.mxu0 0.0
        %1660 = vmatprep.subr.mxu0 0.0
        %1661 = vmatpush1.msra.mxu0 0.0
        %1662 = vmatprep.subr.mxu0 0.0
        %1663 = vmatpush1.msra.mxu0 0.0
        %1664 = vmatprep.subr.mxu0 0.0
        %1665 = vmatpush1.msra.mxu0 0.0
        %1666 = vmatprep.subr.mxu0 0.0
        %1667 = vmatpush1.msra.mxu0 0.0
        %1668 = vmatprep.subr.mxu0 0.0
        %1669 = vmatpush1.msra.mxu0 0.0
        %1670 = vmatprep.mubr.f32.mxu0 0.0
        %1671 = vmatmul.mubr.f32.gmra.mrb[0].mxu0 %v1601
        %v1672 = vpop.f32.mrb[0].mxu0
        %v1673 = vadd.f32 0.0, %v1672
        %v1674 = vpop.f32.mrb[0].mxu0
        %1675 = vmatprep.mubr.f32.mxu0 0.0
        %1676 = vmatmul.mubr.f32.gmra.mrb[0].mxu0 %v1604
        %v1677 = vpop.f32.mrb[0].mxu0
        %v1678 = vadd.f32 0.0, %v1677
        %v1679 = vpop.f32.mrb[0].mxu0
        %1680 = vdwg.mxu0
        %1681 = vrot.lane.b32.xlu0 %v405, 120
        %v1682 = vpop.permute.xlu0 %1681
        %1683 = vrot.lane.b32.xlu0 %v410, 120
        %v1684 = vpop.permute.xlu0 %1683
        %v1688 = vsel %vm1156, %v1325, 0
        %v1691 = vsel %vm1156, %v1326, 0
        %1693 = vmatprep.subr.mxu0 0.0
        %1694 = vmatpush1.msra.mxu0 %v1682
        %1695 = vmatprep.subr.mxu0 0.0
        %1696 = vmatpush1.msra.mxu0 %v1684
        %1697 = vmatprep.subr.mxu0 0.0
        %1698 = vmatpush1.msra.mxu0 0.0
        %1699 = vmatprep.subr.mxu0 0.0
        %1700 = vmatpush1.msra.mxu0 0.0
        %1701 = vmatprep.subr.mxu0 0.0
        %1702 = vmatpush1.msra.mxu0 0.0
        %1703 = vmatprep.subr.mxu0 0.0
        %1704 = vmatpush1.msra.mxu0 0.0
        %1705 = vmatprep.subr.mxu0 0.0
        %1706 = vmatpush1.msra.mxu0 0.0
        %1707 = vmatprep.subr.mxu0 0.0
        %1708 = vmatpush1.msra.mxu0 0.0
        %1709 = vmatprep.subr.mxu0 0.0
        %1710 = vmatpush1.msra.mxu0 0.0
        %1711 = vmatprep.subr.mxu0 0.0
        %1712 = vmatpush1.msra.mxu0 0.0
        %1713 = vmatprep.subr.mxu0 0.0
        %1714 = vmatpush1.msra.mxu0 0.0
        %1715 = vmatprep.subr.mxu0 0.0
        %1716 = vmatpush1.msra.mxu0 0.0
        %1717 = vmatprep.subr.mxu0 0.0
        %1718 = vmatpush1.msra.mxu0 0.0
        %1719 = vmatprep.subr.mxu0 0.0
        %1720 = vmatpush1.msra.mxu0 0.0
        %1721 = vmatprep.subr.mxu0 0.0
        %1722 = vmatpush1.msra.mxu0 0.0
        %1723 = vmatprep.subr.mxu0 0.0
        %1724 = vmatpush1.msra.mxu0 0.0
        %1725 = vmatprep.subr.mxu0 0.0
        %1726 = vmatpush1.msra.mxu0 0.0
        %1727 = vmatprep.subr.mxu0 0.0
        %1728 = vmatpush1.msra.mxu0 0.0
        %1729 = vmatprep.subr.mxu0 0.0
        %1730 = vmatpush1.msra.mxu0 0.0
        %1731 = vmatprep.subr.mxu0 0.0
        %1732 = vmatpush1.msra.mxu0 0.0
        %1733 = vmatprep.subr.mxu0 0.0
        %1734 = vmatpush1.msra.mxu0 0.0
        %1735 = vmatprep.subr.mxu0 0.0
        %1736 = vmatpush1.msra.mxu0 0.0
        %1737 = vmatprep.subr.mxu0 0.0
        %1738 = vmatpush1.msra.mxu0 0.0
        %1739 = vmatprep.subr.mxu0 0.0
        %1740 = vmatpush1.msra.mxu0 0.0
        %1741 = vmatprep.subr.mxu0 0.0
        %1742 = vmatpush1.msra.mxu0 0.0
        %1743 = vmatprep.subr.mxu0 0.0
        %1744 = vmatpush1.msra.mxu0 0.0
        %1745 = vmatprep.subr.mxu0 0.0
        %1746 = vmatpush1.msra.mxu0 0.0
        %1747 = vmatprep.subr.mxu0 0.0
        %1748 = vmatpush1.msra.mxu0 0.0
        %1749 = vmatprep.subr.mxu0 0.0
        %1750 = vmatpush1.msra.mxu0 0.0
        %1751 = vmatprep.subr.mxu0 0.0
        %1752 = vmatpush1.msra.mxu0 0.0
        %1753 = vmatprep.subr.mxu0 0.0
        %1754 = vmatpush1.msra.mxu0 0.0
        %1755 = vmatprep.subr.mxu0 0.0
        %1756 = vmatpush1.msra.mxu0 0.0
        %1757 = vmatprep.mubr.f32.mxu0 0.0
        %1758 = vmatmul.mubr.f32.gmra.mrb[0].mxu0 %v1688
        %v1759 = vpop.f32.mrb[0].mxu0
        %v1760 = vadd.f32 0.0, %v1759
        %v1761 = vpop.f32.mrb[0].mxu0
        %1762 = vmatprep.mubr.f32.mxu0 0.0
        %1763 = vmatmul.mubr.f32.gmra.mrb[0].mxu0 %v1691
        %v1764 = vpop.f32.mrb[0].mxu0
        %v1765 = vadd.f32 0.0, %v1764
        %v1766 = vpop.f32.mrb[0].mxu0
        %1767 = vdwg.mxu0
        %1768 = vrot.lane.b32.xlu0 %v415, 120
        %v1769 = vpop.permute.xlu0 %1768
        %1770 = vrot.lane.b32.xlu0 %v420, 120
        %v1771 = vpop.permute.xlu0 %1770
        %v1775 = vsel %vm1156, %v1327, 0
        %v1778 = vsel %vm1156, %v1328, 0
        %1780 = vmatprep.subr.mxu0 0.0
        %1781 = vmatpush1.msra.mxu0 %v1769
        %1782 = vmatprep.subr.mxu0 0.0
        %1783 = vmatpush1.msra.mxu0 %v1771
        %1784 = vmatprep.subr.mxu0 0.0
        %1785 = vmatpush1.msra.mxu0 0.0
        %1786 = vmatprep.subr.mxu0 0.0
        %1787 = vmatpush1.msra.mxu0 0.0
        %1788 = vmatprep.subr.mxu0 0.0
        %1789 = vmatpush1.msra.mxu0 0.0
        %1790 = vmatprep.subr.mxu0 0.0
        %1791 = vmatpush1.msra.mxu0 0.0
        %1792 = vmatprep.subr.mxu0 0.0
        %1793 = vmatpush1.msra.mxu0 0.0
        %1794 = vmatprep.subr.mxu0 0.0
        %1795 = vmatpush1.msra.mxu0 0.0
        %1796 = vmatprep.subr.mxu0 0.0
        %1797 = vmatpush1.msra.mxu0 0.0
        %1798 = vmatprep.subr.mxu0 0.0
        %1799 = vmatpush1.msra.mxu0 0.0
        %1800 = vmatprep.subr.mxu0 0.0
        %1801 = vmatpush1.msra.mxu0 0.0
        %1802 = vmatprep.subr.mxu0 0.0
        %1803 = vmatpush1.msra.mxu0 0.0
        %1804 = vmatprep.subr.mxu0 0.0
        %1805 = vmatpush1.msra.mxu0 0.0
        %1806 = vmatprep.subr.mxu0 0.0
        %1807 = vmatpush1.msra.mxu0 0.0
        %1808 = vmatprep.subr.mxu0 0.0
        %1809 = vmatpush1.msra.mxu0 0.0
        %1810 = vmatprep.subr.mxu0 0.0
        %1811 = vmatpush1.msra.mxu0 0.0
        %1812 = vmatprep.subr.mxu0 0.0
        %1813 = vmatpush1.msra.mxu0 0.0
        %1814 = vmatprep.subr.mxu0 0.0
        %1815 = vmatpush1.msra.mxu0 0.0
        %1816 = vmatprep.subr.mxu0 0.0
        %1817 = vmatpush1.msra.mxu0 0.0
        %1818 = vmatprep.subr.mxu0 0.0
        %1819 = vmatpush1.msra.mxu0 0.0
        %1820 = vmatprep.subr.mxu0 0.0
        %1821 = vmatpush1.msra.mxu0 0.0
        %1822 = vmatprep.subr.mxu0 0.0
        %1823 = vmatpush1.msra.mxu0 0.0
        %1824 = vmatprep.subr.mxu0 0.0
        %1825 = vmatpush1.msra.mxu0 0.0
        %1826 = vmatprep.subr.mxu0 0.0
        %1827 = vmatpush1.msra.mxu0 0.0
        %1828 = vmatprep.subr.mxu0 0.0
        %1829 = vmatpush1.msra.mxu0 0.0
        %1830 = vmatprep.subr.mxu0 0.0
        %1831 = vmatpush1.msra.mxu0 0.0
        %1832 = vmatprep.subr.mxu0 0.0
        %1833 = vmatpush1.msra.mxu0 0.0
        %1834 = vmatprep.subr.mxu0 0.0
        %1835 = vmatpush1.msra.mxu0 0.0
        %1836 = vmatprep.subr.mxu0 0.0
        %1837 = vmatpush1.msra.mxu0 0.0
        %1838 = vmatprep.subr.mxu0 0.0
        %1839 = vmatpush1.msra.mxu0 0.0
        %1840 = vmatprep.subr.mxu0 0.0
        %1841 = vmatpush1.msra.mxu0 0.0
        %1842 = vmatprep.subr.mxu0 0.0
        %1843 = vmatpush1.msra.mxu0 0.0
        %1844 = vmatprep.mubr.f32.mxu0 0.0
        %1845 = vmatmul.mubr.f32.gmra.mrb[0].mxu0 %v1775
        %v1846 = vpop.f32.mrb[0].mxu0
        %v1847 = vadd.f32 0.0, %v1846
        %v1848 = vpop.f32.mrb[0].mxu0
        %1849 = vmatprep.mubr.f32.mxu0 0.0
        %1850 = vmatmul.mubr.f32.gmra.mrb[0].mxu0 %v1778
        %v1851 = vpop.f32.mrb[0].mxu0
        %v1852 = vadd.f32 0.0, %v1851
        %v1853 = vpop.f32.mrb[0].mxu0
        %1854 = vdwg.mxu0
        %1855 = vrot.lane.b32.xlu0 %v425, 120
        %v1856 = vpop.permute.xlu0 %1855
        %1857 = vrot.lane.b32.xlu0 %v430, 120
        %v1858 = vpop.permute.xlu0 %1857
        %v1862 = vsel %vm1156, %v1329, 0
        %v1865 = vsel %vm1156, %v1330, 0
        %1867 = vmatprep.subr.mxu0 0.0
        %1868 = vmatpush1.msra.mxu0 %v1856
        %1869 = vmatprep.subr.mxu0 0.0
        %1870 = vmatpush1.msra.mxu0 %v1858
        %1871 = vmatprep.subr.mxu0 0.0
        %1872 = vmatpush1.msra.mxu0 0.0
        %1873 = vmatprep.subr.mxu0 0.0
        %1874 = vmatpush1.msra.mxu0 0.0
        %1875 = vmatprep.subr.mxu0 0.0
        %1876 = vmatpush1.msra.mxu0 0.0
        %1877 = vmatprep.subr.mxu0 0.0
        %1878 = vmatpush1.msra.mxu0 0.0
        %1879 = vmatprep.subr.mxu0 0.0
        %1880 = vmatpush1.msra.mxu0 0.0
        %1881 = vmatprep.subr.mxu0 0.0
        %1882 = vmatpush1.msra.mxu0 0.0
        %1883 = vmatprep.subr.mxu0 0.0
        %1884 = vmatpush1.msra.mxu0 0.0
        %1885 = vmatprep.subr.mxu0 0.0
        %1886 = vmatpush1.msra.mxu0 0.0
        %1887 = vmatprep.subr.mxu0 0.0
        %1888 = vmatpush1.msra.mxu0 0.0
        %1889 = vmatprep.subr.mxu0 0.0
        %1890 = vmatpush1.msra.mxu0 0.0
        %1891 = vmatprep.subr.mxu0 0.0
        %1892 = vmatpush1.msra.mxu0 0.0
        %1893 = vmatprep.subr.mxu0 0.0
        %1894 = vmatpush1.msra.mxu0 0.0
        %1895 = vmatprep.subr.mxu0 0.0
        %1896 = vmatpush1.msra.mxu0 0.0
        %1897 = vmatprep.subr.mxu0 0.0
        %1898 = vmatpush1.msra.mxu0 0.0
        %1899 = vmatprep.subr.mxu0 0.0
        %1900 = vmatpush1.msra.mxu0 0.0
        %1901 = vmatprep.subr.mxu0 0.0
        %1902 = vmatpush1.msra.mxu0 0.0
        %1903 = vmatprep.subr.mxu0 0.0
        %1904 = vmatpush1.msra.mxu0 0.0
        %1905 = vmatprep.subr.mxu0 0.0
        %1906 = vmatpush1.msra.mxu0 0.0
        %1907 = vmatprep.subr.mxu0 0.0
        %1908 = vmatpush1.msra.mxu0 0.0
        %1909 = vmatprep.subr.mxu0 0.0
        %1910 = vmatpush1.msra.mxu0 0.0
        %1911 = vmatprep.subr.mxu0 0.0
        %1912 = vmatpush1.msra.mxu0 0.0
        %1913 = vmatprep.subr.mxu0 0.0
        %1914 = vmatpush1.msra.mxu0 0.0
        %1915 = vmatprep.subr.mxu0 0.0
        %1916 = vmatpush1.msra.mxu0 0.0
        %1917 = vmatprep.subr.mxu0 0.0
        %1918 = vmatpush1.msra.mxu0 0.0
        %1919 = vmatprep.subr.mxu0 0.0
        %1920 = vmatpush1.msra.mxu0 0.0
        %1921 = vmatprep.subr.mxu0 0.0
        %1922 = vmatpush1.msra.mxu0 0.0
        %1923 = vmatprep.subr.mxu0 0.0
        %1924 = vmatpush1.msra.mxu0 0.0
        %1925 = vmatprep.subr.mxu0 0.0
        %1926 = vmatpush1.msra.mxu0 0.0
        %1927 = vmatprep.subr.mxu0 0.0
        %1928 = vmatpush1.msra.mxu0 0.0
        %1929 = vmatprep.subr.mxu0 0.0
        %1930 = vmatpush1.msra.mxu0 0.0
        %1931 = vmatprep.mubr.f32.mxu0 0.0
        %1932 = vmatmul.mubr.f32.gmra.mrb[0].mxu0 %v1862
        %v1933 = vpop.f32.mrb[0].mxu0
        %v1934 = vadd.f32 0.0, %v1933
        %v1935 = vpop.f32.mrb[0].mxu0
        %1936 = vmatprep.mubr.f32.mxu0 0.0
        %1937 = vmatmul.mubr.f32.gmra.mrb[0].mxu0 %v1865
        %v1938 = vpop.f32.mrb[0].mxu0
        %v1939 = vadd.f32 0.0, %v1938
        %v1940 = vpop.f32.mrb[0].mxu0
        %1941 = vdwg.mxu0
        %1942 = vrot.lane.b32.xlu0 %v435, 120
        %v1943 = vpop.permute.xlu0 %1942
        %1944 = vrot.lane.b32.xlu0 %v440, 120
        %v1945 = vpop.permute.xlu0 %1944
        %v1949 = vsel %vm1156, %v1331, 0
        %v1952 = vsel %vm1156, %v1332, 0
        %1954 = vmatprep.subr.mxu0 0.0
        %1955 = vmatpush1.msra.mxu0 %v1943
        %1956 = vmatprep.subr.mxu0 0.0
        %1957 = vmatpush1.msra.mxu0 %v1945
        %1958 = vmatprep.subr.mxu0 0.0
        %1959 = vmatpush1.msra.mxu0 0.0
        %1960 = vmatprep.subr.mxu0 0.0
        %1961 = vmatpush1.msra.mxu0 0.0
        %1962 = vmatprep.subr.mxu0 0.0
        %1963 = vmatpush1.msra.mxu0 0.0
        %1964 = vmatprep.subr.mxu0 0.0
        %1965 = vmatpush1.msra.mxu0 0.0
        %1966 = vmatprep.subr.mxu0 0.0
        %1967 = vmatpush1.msra.mxu0 0.0
        %1968 = vmatprep.subr.mxu0 0.0
        %1969 = vmatpush1.msra.mxu0 0.0
        %1970 = vmatprep.subr.mxu0 0.0
        %1971 = vmatpush1.msra.mxu0 0.0
        %1972 = vmatprep.subr.mxu0 0.0
        %1973 = vmatpush1.msra.mxu0 0.0
        %1974 = vmatprep.subr.mxu0 0.0
        %1975 = vmatpush1.msra.mxu0 0.0
        %1976 = vmatprep.subr.mxu0 0.0
        %1977 = vmatpush1.msra.mxu0 0.0
        %1978 = vmatprep.subr.mxu0 0.0
        %1979 = vmatpush1.msra.mxu0 0.0
        %1980 = vmatprep.subr.mxu0 0.0
        %1981 = vmatpush1.msra.mxu0 0.0
        %1982 = vmatprep.subr.mxu0 0.0
        %1983 = vmatpush1.msra.mxu0 0.0
        %1984 = vmatprep.subr.mxu0 0.0
        %1985 = vmatpush1.msra.mxu0 0.0
        %1986 = vmatprep.subr.mxu0 0.0
        %1987 = vmatpush1.msra.mxu0 0.0
        %1988 = vmatprep.subr.mxu0 0.0
        %1989 = vmatpush1.msra.mxu0 0.0
        %1990 = vmatprep.subr.mxu0 0.0
        %1991 = vmatpush1.msra.mxu0 0.0
        %1992 = vmatprep.subr.mxu0 0.0
        %1993 = vmatpush1.msra.mxu0 0.0
        %1994 = vmatprep.subr.mxu0 0.0
        %1995 = vmatpush1.msra.mxu0 0.0
        %1996 = vmatprep.subr.mxu0 0.0
        %1997 = vmatpush1.msra.mxu0 0.0
        %1998 = vmatprep.subr.mxu0 0.0
        %1999 = vmatpush1.msra.mxu0 0.0
        %2000 = vmatprep.subr.mxu0 0.0
        %2001 = vmatpush1.msra.mxu0 0.0
        %2002 = vmatprep.subr.mxu0 0.0
        %2003 = vmatpush1.msra.mxu0 0.0
        %2004 = vmatprep.subr.mxu0 0.0
        %2005 = vmatpush1.msra.mxu0 0.0
        %2006 = vmatprep.subr.mxu0 0.0
        %2007 = vmatpush1.msra.mxu0 0.0
        %2008 = vmatprep.subr.mxu0 0.0
        %2009 = vmatpush1.msra.mxu0 0.0
        %2010 = vmatprep.subr.mxu0 0.0
        %2011 = vmatpush1.msra.mxu0 0.0
        %2012 = vmatprep.subr.mxu0 0.0
        %2013 = vmatpush1.msra.mxu0 0.0
        %2014 = vmatprep.subr.mxu0 0.0
        %2015 = vmatpush1.msra.mxu0 0.0
        %2016 = vmatprep.subr.mxu0 0.0
        %2017 = vmatpush1.msra.mxu0 0.0
        %2018 = vmatprep.mubr.f32.mxu0 0.0
        %2019 = vmatmul.mubr.f32.gmra.mrb[0].mxu0 %v1949
        %v2020 = vpop.f32.mrb[0].mxu0
        %v2021 = vadd.f32 0.0, %v2020
        %v2022 = vpop.f32.mrb[0].mxu0
        %2023 = vmatprep.mubr.f32.mxu0 0.0
        %2024 = vmatmul.mubr.f32.gmra.mrb[0].mxu0 %v1952
        %v2025 = vpop.f32.mrb[0].mxu0
        %v2026 = vadd.f32 0.0, %v2025
        %v2027 = vpop.f32.mrb[0].mxu0
        %2028 = vdwg.mxu0
        %2029 = vst.msk [vmem:[%s220] sm:$0xff] %vm449, %v1412
        %2030 = vst.msk [vmem:[%s220 + $0x8] sm:$0xff] %vm449, %v1417
        %2031 = vst.msk [vmem:[%s220 + $0x10] sm:$0xff] %vm449, %v1499
        %2032 = vst.msk [vmem:[%s220 + $0x18] sm:$0xff] %vm449, %v1504
        %2033 = vst.msk [vmem:[%s220 + $0x20] sm:$0xff] %vm449, %v1586
        %2034 = vst.msk [vmem:[%s220 + $0x28] sm:$0xff] %vm449, %v1591
        %2035 = vst.msk [vmem:[%s220 + $0x30] sm:$0xff] %vm449, %v1673
        %2036 = vst.msk [vmem:[%s220 + $0x38] sm:$0xff] %vm449, %v1678
        %2037 = vst.msk [vmem:[%s220 + $0x40] sm:$0xff] %vm449, %v1760
        %2038 = vst.msk [vmem:[%s220 + $0x48] sm:$0xff] %vm449, %v1765
        %2039 = vst.msk [vmem:[%s220 + $0x50] sm:$0xff] %vm449, %v1847
        %2040 = vst.msk [vmem:[%s220 + $0x58] sm:$0xff] %vm449, %v1852
        %2041 = vst.msk [vmem:[%s220 + $0x60] sm:$0xff] %vm449, %v1934
        %2042 = vst.msk [vmem:[%s220 + $0x68] sm:$0xff] %vm449, %v1939
        %2043 = vst.msk [vmem:[%s220 + $0x70] sm:$0xff] %vm449, %v2021
        %2044 = vst.msk [vmem:[%s220 + $0x78] sm:$0xff] %vm449, %v2026
        %s2045 = smul.u32 8, %s22
        %p2046 = scmp.lt.s32.totalorder %s21, 1
        %s2047 = scalar_select %p2046, %s21, 1
        %p2048 = scmp.lt.s32.totalorder %s2045, 7
        %s2049 = scalar_select %p2048, %s2045, 7
        %s2050 = smul.addr %s2049, 2
        %s2051 = smul.addr %s2047, 16
        %s2052 = sadd.s32 %s2050, %s2051
        %s2053 = smul.addr %s2052, 8
        %s2054 = scalar_lea.vmem %s3, %s2053
        // Predicated region
        $region37: #{tpu_custom_call.1} parent=31 // pred_check
          %p2055 = pneg %p119
        $region38: #{tpu_custom_call.1} parent=31 // pred_check_branch
          %2057 = sbr.rel (%p2055) target = $region40
        $region39: #{tpu_custom_call.1} parent=31 // pred_region
          %s2058 = smul.u32 8, %s22
        $region40: #{tpu_custom_call.1} parent=31 // pred_fallthru
          _
      $region32: #{tpu_custom_call.1} parent=5 // pred_fallthru
        _
      %p2059 = scmp.le.s32.totalorder 2, %s12
      // Predicated region
      $region41: #{tpu_custom_call.1} parent=5 // pred_check
        %p2060 = pneg %p2059
      $region42: #{tpu_custom_call.1} parent=5 // pred_check_branch
        %2062 = sbr.rel (%p2060) target = $region44
      $region43: #{tpu_custom_call.1} parent=5 // pred_region
        %s2063 = ssub.s32 %s12, 2
        // Predicated region
        $region45: #{tpu_custom_call.1} parent=43 // pred_check
          %p2064 = pneg %p125
        $region46: #{tpu_custom_call.1} parent=43 // pred_check_branch
          %2066 = sbr.rel (%p2064) target = $region48
        $region47: #{tpu_custom_call.1} parent=43 // pred_region
          %s2067 = smul.u32 8, %s24
          %p2068 = scmp.lt.s32.totalorder %s23, 1
          %s2069 = scalar_select %p2068, %s23, 1
          %p2070 = scmp.lt.s32.totalorder %s2067, 7
          %s2071 = scalar_select %p2070, %s2067, 7
          %s2072 = smul.addr %s2071, 2
          %s2073 = smul.addr %s2069, 16
          %s2074 = sadd.s32 %s2072, %s2073
          %s2075 = smul.addr %s2074, 8
          %s2076 = scalar_lea.vmem %s3, %s2075
        $region48: #{tpu_custom_call.1} parent=43 // pred_fallthru
          _
      $region44: #{tpu_custom_call.1} parent=5 // pred_fallthru
        _
    $region6: #{tpu_custom_call.1} parent=1 // loop_footer
      %s16 = sadd.s32 1, %s12
    $region7: #{tpu_custom_call.1} parent=1 // loop_footer_branch
      %11 = sbr.rel target = $region3
    $region8: #{tpu_custom_call.1} parent=1 // loop_exit
      _
    %2077 = vsyncpa [#allocation3], 1
    %s2078 = scalar_lea.sflag [#allocation3], 1
    %2079 = vsyncpa %s2078, 1

</llo_original>
